<compile_context>
chip_gen: v7x
topology: tpu7x:2x2x1
jax: 0.10.0
libtpu: 0.0.40
codegen_flags: <defaults>
</compile_context>

<pallas_src>
import math

import jax
import jax.numpy as jnp
import numpy as np
from jax.experimental import pallas as pl
from jax.experimental.pallas import tpu as pltpu

# ---------------- model dims (small, consistent with the module) ----------------
B, S, D = 2, 8, 32          # batch, n_sents, d_model
HEADS = 4
D_FF = 64
NUM_LAYERS = 2              # num_inter_layers
DH = D // HEADS
EPS = 1e-6
NEG_INF = -1e18
BS = B * S
BHS = B * HEADS * S         # rows of the head-stacked attention problem


# ---------------- shared math helpers (used both in kernel and reference) ----------------
def _layernorm(x, g, b):
    mu = jnp.mean(x, axis=-1, keepdims=True)
    xc = x - mu
    var = jnp.mean(xc * xc, axis=-1, keepdims=True)
    return xc * jax.lax.rsqrt(var + EPS) * g + b


def _gelu(x):
    # BertSum gelu (tanh approximation)
    return 0.5 * x * (1.0 + jnp.tanh(math.sqrt(2.0 / math.pi) * (x + 0.044715 * x * x * x)))


def _dot_nt(a, b):
    # a: (M, K), b: (N, K) -> a @ b.T : (M, N), f32 accumulation on the MXU.
    return jax.lax.dot_general(a, b, (((1,), (1,)), ((), ())),
                               preferred_element_type=jnp.float32)


# ---------------- fused Pallas kernel ----------------
def _fused_encoder_kernel(top_ref, maskc_ref, maskf_ref, pe_ref, bias_ref,
                          ln1g_ref, ln1b_ref, wqkv_ref, bqkv_ref, wo_ref, bo_ref,
                          ln2g_ref, ln2b_ref, w1_ref, b1_ref, w2_ref, b2_ref,
                          fing_ref, finb_ref, finw_ref, finbias_ref,
                          out_ref):
    # --- embedding: x = top_vecs * mask + pe  (flattened to (B*S, D)) ---
    x = top_ref[...] * maskc_ref[...] + pe_ref[...]            # (BS, D)
    attn_bias = bias_ref[...]                                  # (BHS, BHS): 0 on own (b,h)
    #                                                          #   block & valid key, else -1e18

    # --- encoder layers (static loop, stacked weights indexed by layer) ---
    for li in range(NUM_LAYERS):
        h = x if li == 0 else _layernorm(x, ln1g_ref[li], ln1b_ref[li])

        # fused Q|K|V projection: (BS, D) @ (D, 3D); 1/sqrt(DH) already folded into Wq/bq
        qkv = jnp.dot(h, wqkv_ref[li], preferred_element_type=jnp.float32) + bqkv_ref[li]

        # head-stack Q/K/V to (B*HEADS*S, DH), block order (b, h). Register-resident.
        q_stk = jnp.concatenate(
            [qkv[b * S:(b + 1) * S, hh * DH:(hh + 1) * DH]
             for b in range(B) for hh in range(HEADS)], axis=0)
        k_stk = jnp.concatenate(
            [qkv[b * S:(b + 1) * S, D + hh * DH:D + (hh + 1) * DH]
             for b in range(B) for hh in range(HEADS)], axis=0)
        v_stk = jnp.concatenate(
            [qkv[b * S:(b + 1) * S, 2 * D + hh * DH:2 * D + (hh + 1) * DH]
             for b in range(B) for hh in range(HEADS)], axis=0)

        # one score matmul + one P.V matmul for ALL batches/heads (block-diag mask)
        s = _dot_nt(q_stk, k_stk) + attn_bias                  # (BHS, BHS)
        s = s - jnp.max(s, axis=-1, keepdims=True)
        p = jnp.exp(s)
        p = p * pl.reciprocal(jnp.sum(p, axis=-1, keepdims=True), approx=True)
        ctx_stk = jnp.dot(p, v_stk, preferred_element_type=jnp.float32)   # (BHS, DH)

        # re-lay heads back onto lanes -> (BS, D); stays in registers (no VMEM scratch)
        ctx = jnp.concatenate(
            [jnp.concatenate(
                [ctx_stk[(b * HEADS + hh) * S:(b * HEADS + hh + 1) * S, :]
                 for hh in range(HEADS)], axis=1)
             for b in range(B)], axis=0)                       # (BS, D)

        attn = jnp.dot(ctx, wo_ref[li],
                       preferred_element_type=jnp.float32) + bo_ref[li]   # (BS, D)
        out1 = attn + x                                        # dropout = identity

        # PositionwiseFeedForward: LN -> gelu(W1) -> W2 -> +residual
        hn = _layernorm(out1, ln2g_ref[li], ln2b_ref[li])
        inter = _gelu(jnp.dot(hn, w1_ref[li], preferred_element_type=jnp.float32) + b1_ref[li])
        x = jnp.dot(inter, w2_ref[li], preferred_element_type=jnp.float32) + b2_ref[li] + out1

    # --- final LN + sigmoid(Linear(D,1)) * mask: one matmul, one lane-dense store ---
    hf = _layernorm(x, fing_ref[...], finb_ref[...])           # (BS, D)
    srow = _dot_nt(finw_ref[...], hf) + finbias_ref[...]       # (1, BS)
    out_ref[...] = jax.nn.sigmoid(srow) * maskf_ref[...]       # single (1, BS) store


# ---------------- pallas_call wrapper ----------------
def _full_spec(shape):
    nd = len(shape)
    return pl.BlockSpec(shape, lambda i, _nd=nd: (0,) * _nd)


def _pack_layer_params(layer_params):
    scale = 1.0 / math.sqrt(DH)

    def stack(name):
        return jnp.stack([p[name] for p in layer_params])

    # fold attention scale into Wq / bq (zero in-kernel cost)
    wqkv = jnp.stack([jnp.concatenate([p["wq"] * scale, p["wk"], p["wv"]], axis=1)
                      for p in layer_params])                  # (L, D, 3D)
    bqkv = jnp.stack([jnp.concatenate([p["bq"] * scale, p["bk"], p["bv"]], axis=1)
                      for p in layer_params])                  # (L, 1, 3D)
    return dict(ln1_g=stack("ln1_g"), ln1_b=stack("ln1_b"),
                wqkv=wqkv, bqkv=bqkv,
                wo=stack("wo"), bo=stack("bo"),
                ln2_g=stack("ln2_g"), ln2_b=stack("ln2_b"),
                w1=stack("w1"), b1=stack("b1"),
                w2=stack("w2"), b2=stack("b2"))


def _make_attn_bias(mask):
    # (BHS, BHS) additive bias: 0 if key col is in the same (batch, head) block as the
    # query row AND the key sentence is valid; -1e18 otherwise (block-diag + key padding).
    idx = jnp.arange(BHS, dtype=jnp.int32)
    blk = idx // S                                             # (b*HEADS + h) per row/col
    same_blk = blk[:, None] == blk[None, :]
    key_batch = blk // HEADS
    key_pos = idx % S
    key_valid = mask[key_batch, key_pos] > 0.5                 # (BHS,) per column
    allowed = same_blk & key_valid[None, :]
    return jnp.where(allowed, 0.0, NEG_INF).astype(jnp.float32)


@jax.jit
def ext_transformer_encoder(top_vecs, mask, pe, layer_params, final_params):
    packed = _pack_layer_params(layer_params)

    top_flat = top_vecs.reshape(BS, D)
    mask_col = mask.reshape(BS, 1).astype(jnp.float32)         # for embedding multiply
    mask_flat = mask.reshape(1, BS).astype(jnp.float32)        # for final score masking
    attn_bias = _make_attn_bias(mask.astype(jnp.float32))      # (BHS, BHS)
    pe_flat = jnp.tile(pe, (B, 1))                             # (BS, D)
    fin_w_row = final_params["wo"].T                           # (1, D)
    fin_bias = final_params["bo"]                              # (1, 1)

    args = [top_flat, mask_col, mask_flat, pe_flat, attn_bias,
            packed["ln1_g"], packed["ln1_b"], packed["wqkv"], packed["bqkv"],
            packed["wo"], packed["bo"], packed["ln2_g"], packed["ln2_b"],
            packed["w1"], packed["b1"], packed["w2"], packed["b2"],
            final_params["ln_g"], final_params["ln_b"], fin_w_row, fin_bias]

    scores_row = pl.pallas_call(
        _fused_encoder_kernel,
        out_shape=jax.ShapeDtypeStruct((1, BS), jnp.float32),
        grid=(1,),
        in_specs=[_full_spec(a.shape) for a in args],
        out_specs=pl.BlockSpec((1, BS), lambda i: (0, 0)),
        compiler_params=pltpu.CompilerParams(dimension_semantics=("arbitrary",)),
    )(*args)
    return scores_row.reshape(B, S)                            # layout plumbing only


# ---------------- pure-JAX reference for validation ----------------
def reference_forward(top_vecs, mask, pe, layer_params, final_params):
    x = top_vecs * mask[:, :, None] + pe[None]
    pad = 1.0 - mask
    for i, p in enumerate(layer_params):
        xin = x
        h = _layernorm(x, p["ln1_g"], p["ln1_b"]) if i != 0 else x
        q = h @ p["wq"] + p["bq"]
        k = h @ p["wk"] + p["bk"]
        v = h @ p["wv"] + p["bv"]
        qh = q.reshape(B, S, HEADS, DH).transpose(0, 2, 1, 3)
        kh = k.reshape(B, S, HEADS, DH).transpose(0, 2, 1, 3)
        vh = v.reshape(B, S, HEADS, DH).transpose(0, 2, 1, 3)
        s = jnp.einsum("bhqd,bhkd->bhqk", qh, kh) / math.sqrt(DH)
        s = jnp.where(pad[:, None, None, :] > 0.0, NEG_INF, s)
        a = jax.nn.softmax(s, axis=-1)
        ctx = jnp.einsum("bhqk,bhkd->bhqd", a, vh).transpose(0, 2, 1, 3).reshape(B, S, D)
        out1 = ctx @ p["wo"] + p["bo"] + xin
        hn = _layernorm(out1, p["ln2_g"], p["ln2_b"])
        x = _gelu(hn @ p["w1"] + p["b1"]) @ p["w2"] + p["b2"] + out1
    h = _layernorm(x, final_params["ln_g"], final_params["ln_b"])
    return jax.nn.sigmoid(h @ final_params["wo"] + final_params["bo"])[..., 0] * mask


# ---------------- deterministic parameter init ----------------
def _init_linear(key, fan_in, fan_out):
    k1, k2 = jax.random.split(key)
    w = jax.random.normal(k1, (fan_in, fan_out), jnp.float32) * 0.05
    b = jax.random.normal(k2, (1, fan_out), jnp.float32) * 0.05
    return w, b


def init_params(key):
    layer_params = []
    for _ in range(NUM_LAYERS):
        ks = jax.random.split(key, 7)
        key = ks[0]
        wq, bq = _init_linear(ks[1], D, D)
        wk, bk = _init_linear(ks[2], D, D)
        wv, bv = _init_linear(ks[3], D, D)
        wo, bo = _init_linear(ks[4], D, D)
        w1, b1 = _init_linear(ks[5], D, D_FF)
        w2, b2 = _init_linear(ks[6], D_FF, D)
        layer_params.append(dict(
            ln1_g=jnp.ones((1, D), jnp.float32), ln1_b=jnp.zeros((1, D), jnp.float32),
            wq=wq, bq=bq, wk=wk, bk=bk, wv=wv, bv=bv, wo=wo, bo=bo,
            ln2_g=jnp.ones((1, D), jnp.float32), ln2_b=jnp.zeros((1, D), jnp.float32),
            w1=w1, b1=b1, w2=w2, b2=b2))
    key, kf = jax.random.split(key)
    wo, bo = _init_linear(kf, D, 1)
    final_params = dict(ln_g=jnp.ones((1, D), jnp.float32),
                        ln_b=jnp.zeros((1, D), jnp.float32),
                        wo=wo, bo=bo)
    return layer_params, final_params


def positional_encoding(n_sents, dim):
    position = jnp.arange(n_sents, dtype=jnp.float32)[:, None]
    div_term = jnp.exp(jnp.arange(0, dim, 2, dtype=jnp.float32) * -(math.log(10000.0) / dim))
    pe = jnp.zeros((n_sents, dim), jnp.float32)
    pe = pe.at[:, 0::2].set(jnp.sin(position * div_term))
    pe = pe.at[:, 1::2].set(jnp.cos(position * div_term))
    return pe


# ---------------- main ----------------
if __name__ == "__main__":
    key = jax.random.PRNGKey(0)
    k_x, k_p = jax.random.split(key)

    top_vecs = jax.random.normal(k_x, (B, S, D), jnp.float32)
    # mask: 1.0 = valid sentence, 0.0 = padding
    mask = jnp.array([[1, 1, 1, 1, 1, 1, 1, 1],
                      [1, 1, 1, 1, 1, 0, 0, 0]], jnp.float32)
    pe = positional_encoding(S, D)
    layer_params, final_params = init_params(k_p)

    out = ext_transformer_encoder(top_vecs, mask, pe, layer_params, final_params)
    out = jax.block_until_ready(out)

    ref = reference_forward(top_vecs, mask, pe, layer_params, final_params)
    np.testing.assert_allclose(np.asarray(out), np.asarray(ref), atol=1e-3, rtol=1e-3)

    print("KERNEL_OK")
</pallas_src>

<mosaic_0001>
module attributes {stable_mosaic.version = 11 : i64} {
  func.func @_fused_encoder_kernel(%arg0: i32, %arg1: memref<16x32xf32, #tpu.memory_space<vmem>>, %arg2: memref<16x1xf32, #tpu.memory_space<vmem>>, %arg3: memref<1x16xf32, #tpu.memory_space<vmem>>, %arg4: memref<16x32xf32, #tpu.memory_space<vmem>>, %arg5: memref<64x64xf32, #tpu.memory_space<vmem>>, %arg6: memref<2x1x32xf32, #tpu.memory_space<vmem>>, %arg7: memref<2x1x32xf32, #tpu.memory_space<vmem>>, %arg8: memref<2x32x96xf32, #tpu.memory_space<vmem>>, %arg9: memref<2x1x96xf32, #tpu.memory_space<vmem>>, %arg10: memref<2x32x32xf32, #tpu.memory_space<vmem>>, %arg11: memref<2x1x32xf32, #tpu.memory_space<vmem>>, %arg12: memref<2x1x32xf32, #tpu.memory_space<vmem>>, %arg13: memref<2x1x32xf32, #tpu.memory_space<vmem>>, %arg14: memref<2x32x64xf32, #tpu.memory_space<vmem>>, %arg15: memref<2x1x64xf32, #tpu.memory_space<vmem>>, %arg16: memref<2x64x32xf32, #tpu.memory_space<vmem>>, %arg17: memref<2x1x32xf32, #tpu.memory_space<vmem>>, %arg18: memref<1x32xf32, #tpu.memory_space<vmem>>, %arg19: memref<1x32xf32, #tpu.memory_space<vmem>>, %arg20: memref<1x32xf32, #tpu.memory_space<vmem>>, %arg21: memref<1x1xf32, #tpu.memory_space<vmem>>, %arg22: memref<1x16xf32, #tpu.memory_space<vmem>>) attributes {dimension_semantics = [#tpu.dimension_semantics<arbitrary>], iteration_bounds = array<i64: 1>, scalar_prefetch = 0 : i64, scratch_operands = 0 : i64, tpu.core_type = #tpu.core_type<tc>, window_params = [{pipeline_mode = #tpu.pipeline_mode<synchronous>, transform_indices = @transform_0, window_bounds = array<i64: 16, 32>}, {pipeline_mode = #tpu.pipeline_mode<synchronous>, transform_indices = @transform_1, window_bounds = array<i64: 16, 1>}, {pipeline_mode = #tpu.pipeline_mode<synchronous>, transform_indices = @transform_2, window_bounds = array<i64: 1, 16>}, {pipeline_mode = #tpu.pipeline_mode<synchronous>, transform_indices = @transform_3, window_bounds = array<i64: 16, 32>}, {pipeline_mode = #tpu.pipeline_mode<synchronous>, transform_indices = @transform_4, window_bounds = array<i64: 64, 64>}, {pipeline_mode = #tpu.pipeline_mode<synchronous>, transform_indices = @transform_5, window_bounds = array<i64: 2, 1, 32>}, {pipeline_mode = #tpu.pipeline_mode<synchronous>, transform_indices = @transform_6, window_bounds = array<i64: 2, 1, 32>}, {pipeline_mode = #tpu.pipeline_mode<synchronous>, transform_indices = @transform_7, window_bounds = array<i64: 2, 32, 96>}, {pipeline_mode = #tpu.pipeline_mode<synchronous>, transform_indices = @transform_8, window_bounds = array<i64: 2, 1, 96>}, {pipeline_mode = #tpu.pipeline_mode<synchronous>, transform_indices = @transform_9, window_bounds = array<i64: 2, 32, 32>}, {pipeline_mode = #tpu.pipeline_mode<synchronous>, transform_indices = @transform_10, window_bounds = array<i64: 2, 1, 32>}, {pipeline_mode = #tpu.pipeline_mode<synchronous>, transform_indices = @transform_11, window_bounds = array<i64: 2, 1, 32>}, {pipeline_mode = #tpu.pipeline_mode<synchronous>, transform_indices = @transform_12, window_bounds = array<i64: 2, 1, 32>}, {pipeline_mode = #tpu.pipeline_mode<synchronous>, transform_indices = @transform_13, window_bounds = array<i64: 2, 32, 64>}, {pipeline_mode = #tpu.pipeline_mode<synchronous>, transform_indices = @transform_14, window_bounds = array<i64: 2, 1, 64>}, {pipeline_mode = #tpu.pipeline_mode<synchronous>, transform_indices = @transform_15, window_bounds = array<i64: 2, 64, 32>}, {pipeline_mode = #tpu.pipeline_mode<synchronous>, transform_indices = @transform_16, window_bounds = array<i64: 2, 1, 32>}, {pipeline_mode = #tpu.pipeline_mode<synchronous>, transform_indices = @transform_17, window_bounds = array<i64: 1, 32>}, {pipeline_mode = #tpu.pipeline_mode<synchronous>, transform_indices = @transform_18, window_bounds = array<i64: 1, 32>}, {pipeline_mode = #tpu.pipeline_mode<synchronous>, transform_indices = @transform_19, window_bounds = array<i64: 1, 32>}, {pipeline_mode = #tpu.pipeline_mode<synchronous>, transform_indices = @transform_20, window_bounds = array<i64: 1, 1>}, {pipeline_mode = #tpu.pipeline_mode<synchronous>, transform_indices = @transform_21, window_bounds = array<i64: 1, 16>}]} {
    %c0 = arith.constant 0 : index
    %c0_0 = arith.constant 0 : index
    %0 = vector.load %arg1[%c0, %c0_0] : memref<16x32xf32, #tpu.memory_space<vmem>>, vector<16x32xf32>
    %c0_1 = arith.constant 0 : index
    %c0_2 = arith.constant 0 : index
    %1 = vector.load %arg2[%c0_1, %c0_2] : memref<16x1xf32, #tpu.memory_space<vmem>>, vector<16x1xf32>
    %2 = vector.broadcast %1 : vector<16x1xf32> to vector<16x32xf32>
    %3 = arith.mulf %0, %2 : vector<16x32xf32>
    %c0_3 = arith.constant 0 : index
    %c0_4 = arith.constant 0 : index
    %4 = vector.load %arg4[%c0_3, %c0_4] : memref<16x32xf32, #tpu.memory_space<vmem>>, vector<16x32xf32>
    %5 = arith.addf %3, %4 : vector<16x32xf32>
    %c0_5 = arith.constant 0 : index
    %c0_6 = arith.constant 0 : index
    %6 = vector.load %arg5[%c0_5, %c0_6] : memref<64x64xf32, #tpu.memory_space<vmem>>, vector<64x64xf32>
    %c0_7 = arith.constant 0 : index
    %c0_8 = arith.constant 0 : index
    %c0_9 = arith.constant 0 : index
    %7 = vector.load %arg8[%c0_7, %c0_8, %c0_9] : memref<2x32x96xf32, #tpu.memory_space<vmem>>, vector<1x32x96xf32>
    %8 = vector.shape_cast %7 : vector<1x32x96xf32> to vector<32x96xf32>
    %cst = arith.constant dense<0.000000e+00> : vector<16x96xf32>
    %9 = tpu.matmul %5, %8, %cst {dimension_numbers = #tpu.dot_dimension_numbers<[1], [0], [0], [1], [0, 0, 1, 1], [], []>} : vector<16x32xf32>, vector<32x96xf32>, vector<16x96xf32> -> vector<16x96xf32>
    %c0_10 = arith.constant 0 : index
    %c0_11 = arith.constant 0 : index
    %c0_12 = arith.constant 0 : index
    %10 = vector.load %arg9[%c0_10, %c0_11, %c0_12] : memref<2x1x96xf32, #tpu.memory_space<vmem>>, vector<1x1x96xf32>
    %11 = vector.shape_cast %10 : vector<1x1x96xf32> to vector<1x96xf32>
    %12 = vector.broadcast %11 : vector<1x96xf32> to vector<16x96xf32>
    %13 = arith.addf %9, %12 : vector<16x96xf32>
    %14 = vector.extract_strided_slice %13 {offsets = [0, 0], sizes = [8, 8], strides = [1, 1]} : vector<16x96xf32> to vector<8x8xf32>
    %15 = vector.extract_strided_slice %13 {offsets = [0, 8], sizes = [8, 8], strides = [1, 1]} : vector<16x96xf32> to vector<8x8xf32>
    %16 = vector.extract_strided_slice %13 {offsets = [0, 16], sizes = [8, 8], strides = [1, 1]} : vector<16x96xf32> to vector<8x8xf32>
    %17 = vector.extract_strided_slice %13 {offsets = [0, 24], sizes = [8, 8], strides = [1, 1]} : vector<16x96xf32> to vector<8x8xf32>
    %18 = vector.extract_strided_slice %13 {offsets = [8, 0], sizes = [8, 8], strides = [1, 1]} : vector<16x96xf32> to vector<8x8xf32>
    %19 = vector.extract_strided_slice %13 {offsets = [8, 8], sizes = [8, 8], strides = [1, 1]} : vector<16x96xf32> to vector<8x8xf32>
    %20 = vector.extract_strided_slice %13 {offsets = [8, 16], sizes = [8, 8], strides = [1, 1]} : vector<16x96xf32> to vector<8x8xf32>
    %21 = vector.extract_strided_slice %13 {offsets = [8, 24], sizes = [8, 8], strides = [1, 1]} : vector<16x96xf32> to vector<8x8xf32>
    %22 = tpu.concatenate %14, %15, %16, %17, %18, %19, %20, %21 in 0 : vector<8x8xf32>, vector<8x8xf32>, vector<8x8xf32>, vector<8x8xf32>, vector<8x8xf32>, vector<8x8xf32>, vector<8x8xf32>, vector<8x8xf32> -> vector<64x8xf32>
    %23 = vector.extract_strided_slice %13 {offsets = [0, 32], sizes = [8, 8], strides = [1, 1]} : vector<16x96xf32> to vector<8x8xf32>
    %24 = vector.extract_strided_slice %13 {offsets = [0, 40], sizes = [8, 8], strides = [1, 1]} : vector<16x96xf32> to vector<8x8xf32>
    %25 = vector.extract_strided_slice %13 {offsets = [0, 48], sizes = [8, 8], strides = [1, 1]} : vector<16x96xf32> to vector<8x8xf32>
    %26 = vector.extract_strided_slice %13 {offsets = [0, 56], sizes = [8, 8], strides = [1, 1]} : vector<16x96xf32> to vector<8x8xf32>
    %27 = vector.extract_strided_slice %13 {offsets = [8, 32], sizes = [8, 8], strides = [1, 1]} : vector<16x96xf32> to vector<8x8xf32>
    %28 = vector.extract_strided_slice %13 {offsets = [8, 40], sizes = [8, 8], strides = [1, 1]} : vector<16x96xf32> to vector<8x8xf32>
    %29 = vector.extract_strided_slice %13 {offsets = [8, 48], sizes = [8, 8], strides = [1, 1]} : vector<16x96xf32> to vector<8x8xf32>
    %30 = vector.extract_strided_slice %13 {offsets = [8, 56], sizes = [8, 8], strides = [1, 1]} : vector<16x96xf32> to vector<8x8xf32>
    %31 = tpu.concatenate %23, %24, %25, %26, %27, %28, %29, %30 in 0 : vector<8x8xf32>, vector<8x8xf32>, vector<8x8xf32>, vector<8x8xf32>, vector<8x8xf32>, vector<8x8xf32>, vector<8x8xf32>, vector<8x8xf32> -> vector<64x8xf32>
    %32 = vector.extract_strided_slice %13 {offsets = [0, 64], sizes = [8, 8], strides = [1, 1]} : vector<16x96xf32> to vector<8x8xf32>
    %33 = vector.extract_strided_slice %13 {offsets = [0, 72], sizes = [8, 8], strides = [1, 1]} : vector<16x96xf32> to vector<8x8xf32>
    %34 = vector.extract_strided_slice %13 {offsets = [0, 80], sizes = [8, 8], strides = [1, 1]} : vector<16x96xf32> to vector<8x8xf32>
    %35 = vector.extract_strided_slice %13 {offsets = [0, 88], sizes = [8, 8], strides = [1, 1]} : vector<16x96xf32> to vector<8x8xf32>
    %36 = vector.extract_strided_slice %13 {offsets = [8, 64], sizes = [8, 8], strides = [1, 1]} : vector<16x96xf32> to vector<8x8xf32>
    %37 = vector.extract_strided_slice %13 {offsets = [8, 72], sizes = [8, 8], strides = [1, 1]} : vector<16x96xf32> to vector<8x8xf32>
    %38 = vector.extract_strided_slice %13 {offsets = [8, 80], sizes = [8, 8], strides = [1, 1]} : vector<16x96xf32> to vector<8x8xf32>
    %39 = vector.extract_strided_slice %13 {offsets = [8, 88], sizes = [8, 8], strides = [1, 1]} : vector<16x96xf32> to vector<8x8xf32>
    %40 = tpu.concatenate %32, %33, %34, %35, %36, %37, %38, %39 in 0 : vector<8x8xf32>, vector<8x8xf32>, vector<8x8xf32>, vector<8x8xf32>, vector<8x8xf32>, vector<8x8xf32>, vector<8x8xf32>, vector<8x8xf32> -> vector<64x8xf32>
    %cst_13 = arith.constant dense<0.000000e+00> : vector<64x64xf32>
    %41 = tpu.matmul %22, %31, %cst_13 {dimension_numbers = #tpu.dot_dimension_numbers<[1], [1], [0], [0], [0, 0, 1, 0], [], []>} : vector<64x8xf32>, vector<64x8xf32>, vector<64x64xf32> -> vector<64x64xf32>
    %42 = arith.addf %41, %6 : vector<64x64xf32>
    %cst_14 = arith.constant dense<0xFF800000> : vector<64xf32>
    %43 = vector.multi_reduction <maximumf>, %42, %cst_14 [1] : vector<64x64xf32> to vector<64xf32>
    %44 = vector.shape_cast %43 : vector<64xf32> to vector<64x1xf32>
    %45 = vector.broadcast %44 : vector<64x1xf32> to vector<64x64xf32>
    %46 = arith.subf %42, %45 : vector<64x64xf32>
    %47 = math.exp %46 : vector<64x64xf32>
    %cst_15 = arith.constant dense<0.000000e+00> : vector<64xf32>
    %48 = vector.multi_reduction <add>, %47, %cst_15 [1] : vector<64x64xf32> to vector<64xf32>
    %49 = vector.shape_cast %48 : vector<64xf32> to vector<64x1xf32>
    %50 = tpu.reciprocal %49 {approx = true} : vector<64x1xf32> -> vector<64x1xf32>
    %51 = vector.broadcast %50 : vector<64x1xf32> to vector<64x64xf32>
    %52 = arith.mulf %47, %51 : vector<64x64xf32>
    %cst_16 = arith.constant dense<0.000000e+00> : vector<64x8xf32>
    %53 = tpu.matmul %52, %40, %cst_16 {dimension_numbers = #tpu.dot_dimension_numbers<[1], [0], [0], [1], [0, 0, 1, 1], [], []>} : vector<64x64xf32>, vector<64x8xf32>, vector<64x8xf32> -> vector<64x8xf32>
    %54 = vector.extract_strided_slice %53 {offsets = [0, 0], sizes = [8, 8], strides = [1, 1]} : vector<64x8xf32> to vector<8x8xf32>
    %55 = vector.extract_strided_slice %53 {offsets = [8, 0], sizes = [8, 8], strides = [1, 1]} : vector<64x8xf32> to vector<8x8xf32>
    %56 = vector.extract_strided_slice %53 {offsets = [16, 0], sizes = [8, 8], strides = [1, 1]} : vector<64x8xf32> to vector<8x8xf32>
    %57 = vector.extract_strided_slice %53 {offsets = [24, 0], sizes = [8, 8], strides = [1, 1]} : vector<64x8xf32> to vector<8x8xf32>
    %58 = tpu.concatenate %54, %55, %56, %57 in 1 : vector<8x8xf32>, vector<8x8xf32>, vector<8x8xf32>, vector<8x8xf32> -> vector<8x32xf32>
    %59 = vector.extract_strided_slice %53 {offsets = [32, 0], sizes = [8, 8], strides = [1, 1]} : vector<64x8xf32> to vector<8x8xf32>
    %60 = vector.extract_strided_slice %53 {offsets = [40, 0], sizes = [8, 8], strides = [1, 1]} : vector<64x8xf32> to vector<8x8xf32>
    %61 = vector.extract_strided_slice %53 {offsets = [48, 0], sizes = [8, 8], strides = [1, 1]} : vector<64x8xf32> to vector<8x8xf32>
    %62 = vector.extract_strided_slice %53 {offsets = [56, 0], sizes = [8, 8], strides = [1, 1]} : vector<64x8xf32> to vector<8x8xf32>
    %63 = tpu.concatenate %59, %60, %61, %62 in 1 : vector<8x8xf32>, vector<8x8xf32>, vector<8x8xf32>, vector<8x8xf32> -> vector<8x32xf32>
    %64 = tpu.concatenate %58, %63 in 0 : vector<8x32xf32>, vector<8x32xf32> -> vector<16x32xf32>
    %c0_17 = arith.constant 0 : index
    %c0_18 = arith.constant 0 : index
    %c0_19 = arith.constant 0 : index
    %65 = vector.load %arg10[%c0_17, %c0_18, %c0_19] : memref<2x32x32xf32, #tpu.memory_space<vmem>>, vector<1x32x32xf32>
    %66 = vector.shape_cast %65 : vector<1x32x32xf32> to vector<32x32xf32>
    %cst_20 = arith.constant dense<0.000000e+00> : vector<16x32xf32>
    %67 = tpu.matmul %64, %66, %cst_20 {dimension_numbers = #tpu.dot_dimension_numbers<[1], [0], [0], [1], [0, 0, 1, 1], [], []>} : vector<16x32xf32>, vector<32x32xf32>, vector<16x32xf32> -> vector<16x32xf32>
    %c0_21 = arith.constant 0 : index
    %c0_22 = arith.constant 0 : index
    %c0_23 = arith.constant 0 : index
    %68 = vector.load %arg11[%c0_21, %c0_22, %c0_23] : memref<2x1x32xf32, #tpu.memory_space<vmem>>, vector<1x1x32xf32>
    %69 = vector.shape_cast %68 : vector<1x1x32xf32> to vector<1x32xf32>
    %70 = vector.broadcast %69 : vector<1x32xf32> to vector<16x32xf32>
    %71 = arith.addf %67, %70 : vector<16x32xf32>
    %72 = arith.addf %71, %5 : vector<16x32xf32>
    %c0_24 = arith.constant 0 : index
    %c0_25 = arith.constant 0 : index
    %c0_26 = arith.constant 0 : index
    %73 = vector.load %arg12[%c0_24, %c0_25, %c0_26] : memref<2x1x32xf32, #tpu.memory_space<vmem>>, vector<1x1x32xf32>
    %74 = vector.shape_cast %73 : vector<1x1x32xf32> to vector<1x32xf32>
    %c0_27 = arith.constant 0 : index
    %c0_28 = arith.constant 0 : index
    %c0_29 = arith.constant 0 : index
    %75 = vector.load %arg13[%c0_27, %c0_28, %c0_29] : memref<2x1x32xf32, #tpu.memory_space<vmem>>, vector<1x1x32xf32>
    %76 = vector.shape_cast %75 : vector<1x1x32xf32> to vector<1x32xf32>
    %cst_30 = arith.constant dense<0.000000e+00> : vector<16xf32>
    %77 = vector.multi_reduction <add>, %72, %cst_30 [1] : vector<16x32xf32> to vector<16xf32>
    %78 = vector.shape_cast %77 : vector<16xf32> to vector<16x1xf32>
    %cst_31 = arith.constant 3.200000e+01 : f32
    %79 = vector.broadcast %cst_31 : f32 to vector<16x1xf32>
    %80 = arith.divf %78, %79 : vector<16x1xf32>
    %81 = vector.broadcast %80 : vector<16x1xf32> to vector<16x32xf32>
    %82 = arith.subf %72, %81 : vector<16x32xf32>
    %83 = arith.mulf %82, %82 : vector<16x32xf32>
    %cst_32 = arith.constant dense<0.000000e+00> : vector<16xf32>
    %84 = vector.multi_reduction <add>, %83, %cst_32 [1] : vector<16x32xf32> to vector<16xf32>
    %85 = vector.shape_cast %84 : vector<16xf32> to vector<16x1xf32>
    %cst_33 = arith.constant 3.200000e+01 : f32
    %86 = vector.broadcast %cst_33 : f32 to vector<16x1xf32>
    %87 = arith.divf %85, %86 : vector<16x1xf32>
    %cst_34 = arith.constant 9.99999997E-7 : f32
    %88 = vector.broadcast %cst_34 : f32 to vector<16x1xf32>
    %89 = arith.addf %87, %88 : vector<16x1xf32>
    %90 = math.rsqrt %89 : vector<16x1xf32>
    %91 = vector.broadcast %90 : vector<16x1xf32> to vector<16x32xf32>
    %92 = arith.mulf %82, %91 : vector<16x32xf32>
    %93 = vector.broadcast %74 : vector<1x32xf32> to vector<16x32xf32>
    %94 = arith.mulf %92, %93 : vector<16x32xf32>
    %95 = vector.broadcast %76 : vector<1x32xf32> to vector<16x32xf32>
    %96 = arith.addf %94, %95 : vector<16x32xf32>
    %c0_35 = arith.constant 0 : index
    %c0_36 = arith.constant 0 : index
    %c0_37 = arith.constant 0 : index
    %97 = vector.load %arg14[%c0_35, %c0_36, %c0_37] : memref<2x32x64xf32, #tpu.memory_space<vmem>>, vector<1x32x64xf32>
    %98 = vector.shape_cast %97 : vector<1x32x64xf32> to vector<32x64xf32>
    %cst_38 = arith.constant dense<0.000000e+00> : vector<16x64xf32>
    %99 = tpu.matmul %96, %98, %cst_38 {dimension_numbers = #tpu.dot_dimension_numbers<[1], [0], [0], [1], [0, 0, 1, 1], [], []>} : vector<16x32xf32>, vector<32x64xf32>, vector<16x64xf32> -> vector<16x64xf32>
    %c0_39 = arith.constant 0 : index
    %c0_40 = arith.constant 0 : index
    %c0_41 = arith.constant 0 : index
    %100 = vector.load %arg15[%c0_39, %c0_40, %c0_41] : memref<2x1x64xf32, #tpu.memory_space<vmem>>, vector<1x1x64xf32>
    %101 = vector.shape_cast %100 : vector<1x1x64xf32> to vector<1x64xf32>
    %102 = vector.broadcast %101 : vector<1x64xf32> to vector<16x64xf32>
    %103 = arith.addf %99, %102 : vector<16x64xf32>
    %cst_42 = arith.constant 5.000000e-01 : f32
    %104 = vector.broadcast %cst_42 : f32 to vector<16x64xf32>
    %105 = arith.mulf %104, %103 : vector<16x64xf32>
    %cst_43 = arith.constant 4.471500e-02 : f32
    %106 = vector.broadcast %cst_43 : f32 to vector<16x64xf32>
    %107 = arith.mulf %106, %103 : vector<16x64xf32>
    %108 = arith.mulf %107, %103 : vector<16x64xf32>
    %109 = arith.mulf %108, %103 : vector<16x64xf32>
    %110 = arith.addf %103, %109 : vector<16x64xf32>
    %cst_44 = arith.constant 0.797884583 : f32
    %111 = vector.broadcast %cst_44 : f32 to vector<16x64xf32>
    %112 = arith.mulf %111, %110 : vector<16x64xf32>
    %113 = math.tanh %112 : vector<16x64xf32>
    %cst_45 = arith.constant 1.000000e+00 : f32
    %114 = vector.broadcast %cst_45 : f32 to vector<16x64xf32>
    %115 = arith.addf %114, %113 : vector<16x64xf32>
    %116 = arith.mulf %105, %115 : vector<16x64xf32>
    %c0_46 = arith.constant 0 : index
    %c0_47 = arith.constant 0 : index
    %c0_48 = arith.constant 0 : index
    %117 = vector.load %arg16[%c0_46, %c0_47, %c0_48] : memref<2x64x32xf32, #tpu.memory_space<vmem>>, vector<1x64x32xf32>
    %118 = vector.shape_cast %117 : vector<1x64x32xf32> to vector<64x32xf32>
    %cst_49 = arith.constant dense<0.000000e+00> : vector<16x32xf32>
    %119 = tpu.matmul %116, %118, %cst_49 {dimension_numbers = #tpu.dot_dimension_numbers<[1], [0], [0], [1], [0, 0, 1, 1], [], []>} : vector<16x64xf32>, vector<64x32xf32>, vector<16x32xf32> -> vector<16x32xf32>
    %c0_50 = arith.constant 0 : index
    %c0_51 = arith.constant 0 : index
    %c0_52 = arith.constant 0 : index
    %120 = vector.load %arg17[%c0_50, %c0_51, %c0_52] : memref<2x1x32xf32, #tpu.memory_space<vmem>>, vector<1x1x32xf32>
    %121 = vector.shape_cast %120 : vector<1x1x32xf32> to vector<1x32xf32>
    %122 = vector.broadcast %121 : vector<1x32xf32> to vector<16x32xf32>
    %123 = arith.addf %119, %122 : vector<16x32xf32>
    %124 = arith.addf %123, %72 : vector<16x32xf32>
    %c1 = arith.constant 1 : index
    %c0_53 = arith.constant 0 : index
    %c0_54 = arith.constant 0 : index
    %125 = vector.load %arg6[%c1, %c0_53, %c0_54] : memref<2x1x32xf32, #tpu.memory_space<vmem>>, vector<1x1x32xf32>
    %126 = vector.shape_cast %125 : vector<1x1x32xf32> to vector<1x32xf32>
    %c1_55 = arith.constant 1 : index
    %c0_56 = arith.constant 0 : index
    %c0_57 = arith.constant 0 : index
    %127 = vector.load %arg7[%c1_55, %c0_56, %c0_57] : memref<2x1x32xf32, #tpu.memory_space<vmem>>, vector<1x1x32xf32>
    %128 = vector.shape_cast %127 : vector<1x1x32xf32> to vector<1x32xf32>
    %cst_58 = arith.constant dense<0.000000e+00> : vector<16xf32>
    %129 = vector.multi_reduction <add>, %124, %cst_58 [1] : vector<16x32xf32> to vector<16xf32>
    %130 = vector.shape_cast %129 : vector<16xf32> to vector<16x1xf32>
    %cst_59 = arith.constant 3.200000e+01 : f32
    %131 = vector.broadcast %cst_59 : f32 to vector<16x1xf32>
    %132 = arith.divf %130, %131 : vector<16x1xf32>
    %133 = vector.broadcast %132 : vector<16x1xf32> to vector<16x32xf32>
    %134 = arith.subf %124, %133 : vector<16x32xf32>
    %135 = arith.mulf %134, %134 : vector<16x32xf32>
    %cst_60 = arith.constant dense<0.000000e+00> : vector<16xf32>
    %136 = vector.multi_reduction <add>, %135, %cst_60 [1] : vector<16x32xf32> to vector<16xf32>
    %137 = vector.shape_cast %136 : vector<16xf32> to vector<16x1xf32>
    %cst_61 = arith.constant 3.200000e+01 : f32
    %138 = vector.broadcast %cst_61 : f32 to vector<16x1xf32>
    %139 = arith.divf %137, %138 : vector<16x1xf32>
    %cst_62 = arith.constant 9.99999997E-7 : f32
    %140 = vector.broadcast %cst_62 : f32 to vector<16x1xf32>
    %141 = arith.addf %139, %140 : vector<16x1xf32>
    %142 = math.rsqrt %141 : vector<16x1xf32>
    %143 = vector.broadcast %142 : vector<16x1xf32> to vector<16x32xf32>
    %144 = arith.mulf %134, %143 : vector<16x32xf32>
    %145 = vector.broadcast %126 : vector<1x32xf32> to vector<16x32xf32>
    %146 = arith.mulf %144, %145 : vector<16x32xf32>
    %147 = vector.broadcast %128 : vector<1x32xf32> to vector<16x32xf32>
    %148 = arith.addf %146, %147 : vector<16x32xf32>
    %c1_63 = arith.constant 1 : index
    %c0_64 = arith.constant 0 : index
    %c0_65 = arith.constant 0 : index
    %149 = vector.load %arg8[%c1_63, %c0_64, %c0_65] : memref<2x32x96xf32, #tpu.memory_space<vmem>>, vector<1x32x96xf32>
    %150 = vector.shape_cast %149 : vector<1x32x96xf32> to vector<32x96xf32>
    %cst_66 = arith.constant dense<0.000000e+00> : vector<16x96xf32>
    %151 = tpu.matmul %148, %150, %cst_66 {dimension_numbers = #tpu.dot_dimension_numbers<[1], [0], [0], [1], [0, 0, 1, 1], [], []>} : vector<16x32xf32>, vector<32x96xf32>, vector<16x96xf32> -> vector<16x96xf32>
    %c1_67 = arith.constant 1 : index
    %c0_68 = arith.constant 0 : index
    %c0_69 = arith.constant 0 : index
    %152 = vector.load %arg9[%c1_67, %c0_68, %c0_69] : memref<2x1x96xf32, #tpu.memory_space<vmem>>, vector<1x1x96xf32>
    %153 = vector.shape_cast %152 : vector<1x1x96xf32> to vector<1x96xf32>
    %154 = vector.broadcast %153 : vector<1x96xf32> to vector<16x96xf32>
    %155 = arith.addf %151, %154 : vector<16x96xf32>
    %156 = vector.extract_strided_slice %155 {offsets = [0, 0], sizes = [8, 8], strides = [1, 1]} : vector<16x96xf32> to vector<8x8xf32>
    %157 = vector.extract_strided_slice %155 {offsets = [0, 8], sizes = [8, 8], strides = [1, 1]} : vector<16x96xf32> to vector<8x8xf32>
    %158 = vector.extract_strided_slice %155 {offsets = [0, 16], sizes = [8, 8], strides = [1, 1]} : vector<16x96xf32> to vector<8x8xf32>
    %159 = vector.extract_strided_slice %155 {offsets = [0, 24], sizes = [8, 8], strides = [1, 1]} : vector<16x96xf32> to vector<8x8xf32>
    %160 = vector.extract_strided_slice %155 {offsets = [8, 0], sizes = [8, 8], strides = [1, 1]} : vector<16x96xf32> to vector<8x8xf32>
    %161 = vector.extract_strided_slice %155 {offsets = [8, 8], sizes = [8, 8], strides = [1, 1]} : vector<16x96xf32> to vector<8x8xf32>
    %162 = vector.extract_strided_slice %155 {offsets = [8, 16], sizes = [8, 8], strides = [1, 1]} : vector<16x96xf32> to vector<8x8xf32>
    %163 = vector.extract_strided_slice %155 {offsets = [8, 24], sizes = [8, 8], strides = [1, 1]} : vector<16x96xf32> to vector<8x8xf32>
    %164 = tpu.concatenate %156, %157, %158, %159, %160, %161, %162, %163 in 0 : vector<8x8xf32>, vector<8x8xf32>, vector<8x8xf32>, vector<8x8xf32>, vector<8x8xf32>, vector<8x8xf32>, vector<8x8xf32>, vector<8x8xf32> -> vector<64x8xf32>
    %165 = vector.extract_strided_slice %155 {offsets = [0, 32], sizes = [8, 8], strides = [1, 1]} : vector<16x96xf32> to vector<8x8xf32>
    %166 = vector.extract_strided_slice %155 {offsets = [0, 40], sizes = [8, 8], strides = [1, 1]} : vector<16x96xf32> to vector<8x8xf32>
    %167 = vector.extract_strided_slice %155 {offsets = [0, 48], sizes = [8, 8], strides = [1, 1]} : vector<16x96xf32> to vector<8x8xf32>
    %168 = vector.extract_strided_slice %155 {offsets = [0, 56], sizes = [8, 8], strides = [1, 1]} : vector<16x96xf32> to vector<8x8xf32>
    %169 = vector.extract_strided_slice %155 {offsets = [8, 32], sizes = [8, 8], strides = [1, 1]} : vector<16x96xf32> to vector<8x8xf32>
    %170 = vector.extract_strided_slice %155 {offsets = [8, 40], sizes = [8, 8], strides = [1, 1]} : vector<16x96xf32> to vector<8x8xf32>
    %171 = vector.extract_strided_slice %155 {offsets = [8, 48], sizes = [8, 8], strides = [1, 1]} : vector<16x96xf32> to vector<8x8xf32>
    %172 = vector.extract_strided_slice %155 {offsets = [8, 56], sizes = [8, 8], strides = [1, 1]} : vector<16x96xf32> to vector<8x8xf32>
    %173 = tpu.concatenate %165, %166, %167, %168, %169, %170, %171, %172 in 0 : vector<8x8xf32>, vector<8x8xf32>, vector<8x8xf32>, vector<8x8xf32>, vector<8x8xf32>, vector<8x8xf32>, vector<8x8xf32>, vector<8x8xf32> -> vector<64x8xf32>
    %174 = vector.extract_strided_slice %155 {offsets = [0, 64], sizes = [8, 8], strides = [1, 1]} : vector<16x96xf32> to vector<8x8xf32>
    %175 = vector.extract_strided_slice %155 {offsets = [0, 72], sizes = [8, 8], strides = [1, 1]} : vector<16x96xf32> to vector<8x8xf32>
    %176 = vector.extract_strided_slice %155 {offsets = [0, 80], sizes = [8, 8], strides = [1, 1]} : vector<16x96xf32> to vector<8x8xf32>
    %177 = vector.extract_strided_slice %155 {offsets = [0, 88], sizes = [8, 8], strides = [1, 1]} : vector<16x96xf32> to vector<8x8xf32>
    %178 = vector.extract_strided_slice %155 {offsets = [8, 64], sizes = [8, 8], strides = [1, 1]} : vector<16x96xf32> to vector<8x8xf32>
    %179 = vector.extract_strided_slice %155 {offsets = [8, 72], sizes = [8, 8], strides = [1, 1]} : vector<16x96xf32> to vector<8x8xf32>
    %180 = vector.extract_strided_slice %155 {offsets = [8, 80], sizes = [8, 8], strides = [1, 1]} : vector<16x96xf32> to vector<8x8xf32>
    %181 = vector.extract_strided_slice %155 {offsets = [8, 88], sizes = [8, 8], strides = [1, 1]} : vector<16x96xf32> to vector<8x8xf32>
    %182 = tpu.concatenate %174, %175, %176, %177, %178, %179, %180, %181 in 0 : vector<8x8xf32>, vector<8x8xf32>, vector<8x8xf32>, vector<8x8xf32>, vector<8x8xf32>, vector<8x8xf32>, vector<8x8xf32>, vector<8x8xf32> -> vector<64x8xf32>
    %cst_70 = arith.constant dense<0.000000e+00> : vector<64x64xf32>
    %183 = tpu.matmul %164, %173, %cst_70 {dimension_numbers = #tpu.dot_dimension_numbers<[1], [1], [0], [0], [0, 0, 1, 0], [], []>} : vector<64x8xf32>, vector<64x8xf32>, vector<64x64xf32> -> vector<64x64xf32>
    %184 = arith.addf %183, %6 : vector<64x64xf32>
    %cst_71 = arith.constant dense<0xFF800000> : vector<64xf32>
    %185 = vector.multi_reduction <maximumf>, %184, %cst_71 [1] : vector<64x64xf32> to vector<64xf32>
    %186 = vector.shape_cast %185 : vector<64xf32> to vector<64x1xf32>
    %187 = vector.broadcast %186 : vector<64x1xf32> to vector<64x64xf32>
    %188 = arith.subf %184, %187 : vector<64x64xf32>
    %189 = math.exp %188 : vector<64x64xf32>
    %cst_72 = arith.constant dense<0.000000e+00> : vector<64xf32>
    %190 = vector.multi_reduction <add>, %189, %cst_72 [1] : vector<64x64xf32> to vector<64xf32>
    %191 = vector.shape_cast %190 : vector<64xf32> to vector<64x1xf32>
    %192 = tpu.reciprocal %191 {approx = true} : vector<64x1xf32> -> vector<64x1xf32>
    %193 = vector.broadcast %192 : vector<64x1xf32> to vector<64x64xf32>
    %194 = arith.mulf %189, %193 : vector<64x64xf32>
    %cst_73 = arith.constant dense<0.000000e+00> : vector<64x8xf32>
    %195 = tpu.matmul %194, %182, %cst_73 {dimension_numbers = #tpu.dot_dimension_numbers<[1], [0], [0], [1], [0, 0, 1, 1], [], []>} : vector<64x64xf32>, vector<64x8xf32>, vector<64x8xf32> -> vector<64x8xf32>
    %196 = vector.extract_strided_slice %195 {offsets = [0, 0], sizes = [8, 8], strides = [1, 1]} : vector<64x8xf32> to vector<8x8xf32>
    %197 = vector.extract_strided_slice %195 {offsets = [8, 0], sizes = [8, 8], strides = [1, 1]} : vector<64x8xf32> to vector<8x8xf32>
    %198 = vector.extract_strided_slice %195 {offsets = [16, 0], sizes = [8, 8], strides = [1, 1]} : vector<64x8xf32> to vector<8x8xf32>
    %199 = vector.extract_strided_slice %195 {offsets = [24, 0], sizes = [8, 8], strides = [1, 1]} : vector<64x8xf32> to vector<8x8xf32>
    %200 = tpu.concatenate %196, %197, %198, %199 in 1 : vector<8x8xf32>, vector<8x8xf32>, vector<8x8xf32>, vector<8x8xf32> -> vector<8x32xf32>
    %201 = vector.extract_strided_slice %195 {offsets = [32, 0], sizes = [8, 8], strides = [1, 1]} : vector<64x8xf32> to vector<8x8xf32>
    %202 = vector.extract_strided_slice %195 {offsets = [40, 0], sizes = [8, 8], strides = [1, 1]} : vector<64x8xf32> to vector<8x8xf32>
    %203 = vector.extract_strided_slice %195 {offsets = [48, 0], sizes = [8, 8], strides = [1, 1]} : vector<64x8xf32> to vector<8x8xf32>
    %204 = vector.extract_strided_slice %195 {offsets = [56, 0], sizes = [8, 8], strides = [1, 1]} : vector<64x8xf32> to vector<8x8xf32>
    %205 = tpu.concatenate %201, %202, %203, %204 in 1 : vector<8x8xf32>, vector<8x8xf32>, vector<8x8xf32>, vector<8x8xf32> -> vector<8x32xf32>
    %206 = tpu.concatenate %200, %205 in 0 : vector<8x32xf32>, vector<8x32xf32> -> vector<16x32xf32>
    %c1_74 = arith.constant 1 : index
    %c0_75 = arith.constant 0 : index
    %c0_76 = arith.constant 0 : index
    %207 = vector.load %arg10[%c1_74, %c0_75, %c0_76] : memref<2x32x32xf32, #tpu.memory_space<vmem>>, vector<1x32x32xf32>
    %208 = vector.shape_cast %207 : vector<1x32x32xf32> to vector<32x32xf32>
    %cst_77 = arith.constant dense<0.000000e+00> : vector<16x32xf32>
    %209 = tpu.matmul %206, %208, %cst_77 {dimension_numbers = #tpu.dot_dimension_numbers<[1], [0], [0], [1], [0, 0, 1, 1], [], []>} : vector<16x32xf32>, vector<32x32xf32>, vector<16x32xf32> -> vector<16x32xf32>
    %c1_78 = arith.constant 1 : index
    %c0_79 = arith.constant 0 : index
    %c0_80 = arith.constant 0 : index
    %210 = vector.load %arg11[%c1_78, %c0_79, %c0_80] : memref<2x1x32xf32, #tpu.memory_space<vmem>>, vector<1x1x32xf32>
    %211 = vector.shape_cast %210 : vector<1x1x32xf32> to vector<1x32xf32>
    %212 = vector.broadcast %211 : vector<1x32xf32> to vector<16x32xf32>
    %213 = arith.addf %209, %212 : vector<16x32xf32>
    %214 = arith.addf %213, %124 : vector<16x32xf32>
    %c1_81 = arith.constant 1 : index
    %c0_82 = arith.constant 0 : index
    %c0_83 = arith.constant 0 : index
    %215 = vector.load %arg12[%c1_81, %c0_82, %c0_83] : memref<2x1x32xf32, #tpu.memory_space<vmem>>, vector<1x1x32xf32>
    %216 = vector.shape_cast %215 : vector<1x1x32xf32> to vector<1x32xf32>
    %c1_84 = arith.constant 1 : index
    %c0_85 = arith.constant 0 : index
    %c0_86 = arith.constant 0 : index
    %217 = vector.load %arg13[%c1_84, %c0_85, %c0_86] : memref<2x1x32xf32, #tpu.memory_space<vmem>>, vector<1x1x32xf32>
    %218 = vector.shape_cast %217 : vector<1x1x32xf32> to vector<1x32xf32>
    %cst_87 = arith.constant dense<0.000000e+00> : vector<16xf32>
    %219 = vector.multi_reduction <add>, %214, %cst_87 [1] : vector<16x32xf32> to vector<16xf32>
    %220 = vector.shape_cast %219 : vector<16xf32> to vector<16x1xf32>
    %cst_88 = arith.constant 3.200000e+01 : f32
    %221 = vector.broadcast %cst_88 : f32 to vector<16x1xf32>
    %222 = arith.divf %220, %221 : vector<16x1xf32>
    %223 = vector.broadcast %222 : vector<16x1xf32> to vector<16x32xf32>
    %224 = arith.subf %214, %223 : vector<16x32xf32>
    %225 = arith.mulf %224, %224 : vector<16x32xf32>
    %cst_89 = arith.constant dense<0.000000e+00> : vector<16xf32>
    %226 = vector.multi_reduction <add>, %225, %cst_89 [1] : vector<16x32xf32> to vector<16xf32>
    %227 = vector.shape_cast %226 : vector<16xf32> to vector<16x1xf32>
    %cst_90 = arith.constant 3.200000e+01 : f32
    %228 = vector.broadcast %cst_90 : f32 to vector<16x1xf32>
    %229 = arith.divf %227, %228 : vector<16x1xf32>
    %cst_91 = arith.constant 9.99999997E-7 : f32
    %230 = vector.broadcast %cst_91 : f32 to vector<16x1xf32>
    %231 = arith.addf %229, %230 : vector<16x1xf32>
    %232 = math.rsqrt %231 : vector<16x1xf32>
    %233 = vector.broadcast %232 : vector<16x1xf32> to vector<16x32xf32>
    %234 = arith.mulf %224, %233 : vector<16x32xf32>
    %235 = vector.broadcast %216 : vector<1x32xf32> to vector<16x32xf32>
    %236 = arith.mulf %234, %235 : vector<16x32xf32>
    %237 = vector.broadcast %218 : vector<1x32xf32> to vector<16x32xf32>
    %238 = arith.addf %236, %237 : vector<16x32xf32>
    %c1_92 = arith.constant 1 : index
    %c0_93 = arith.constant 0 : index
    %c0_94 = arith.constant 0 : index
    %239 = vector.load %arg14[%c1_92, %c0_93, %c0_94] : memref<2x32x64xf32, #tpu.memory_space<vmem>>, vector<1x32x64xf32>
    %240 = vector.shape_cast %239 : vector<1x32x64xf32> to vector<32x64xf32>
    %cst_95 = arith.constant dense<0.000000e+00> : vector<16x64xf32>
    %241 = tpu.matmul %238, %240, %cst_95 {dimension_numbers = #tpu.dot_dimension_numbers<[1], [0], [0], [1], [0, 0, 1, 1], [], []>} : vector<16x32xf32>, vector<32x64xf32>, vector<16x64xf32> -> vector<16x64xf32>
    %c1_96 = arith.constant 1 : index
    %c0_97 = arith.constant 0 : index
    %c0_98 = arith.constant 0 : index
    %242 = vector.load %arg15[%c1_96, %c0_97, %c0_98] : memref<2x1x64xf32, #tpu.memory_space<vmem>>, vector<1x1x64xf32>
    %243 = vector.shape_cast %242 : vector<1x1x64xf32> to vector<1x64xf32>
    %244 = vector.broadcast %243 : vector<1x64xf32> to vector<16x64xf32>
    %245 = arith.addf %241, %244 : vector<16x64xf32>
    %cst_99 = arith.constant 5.000000e-01 : f32
    %246 = vector.broadcast %cst_99 : f32 to vector<16x64xf32>
    %247 = arith.mulf %246, %245 : vector<16x64xf32>
    %cst_100 = arith.constant 4.471500e-02 : f32
    %248 = vector.broadcast %cst_100 : f32 to vector<16x64xf32>
    %249 = arith.mulf %248, %245 : vector<16x64xf32>
    %250 = arith.mulf %249, %245 : vector<16x64xf32>
    %251 = arith.mulf %250, %245 : vector<16x64xf32>
    %252 = arith.addf %245, %251 : vector<16x64xf32>
    %cst_101 = arith.constant 0.797884583 : f32
    %253 = vector.broadcast %cst_101 : f32 to vector<16x64xf32>
    %254 = arith.mulf %253, %252 : vector<16x64xf32>
    %255 = math.tanh %254 : vector<16x64xf32>
    %cst_102 = arith.constant 1.000000e+00 : f32
    %256 = vector.broadcast %cst_102 : f32 to vector<16x64xf32>
    %257 = arith.addf %256, %255 : vector<16x64xf32>
    %258 = arith.mulf %247, %257 : vector<16x64xf32>
    %c1_103 = arith.constant 1 : index
    %c0_104 = arith.constant 0 : index
    %c0_105 = arith.constant 0 : index
    %259 = vector.load %arg16[%c1_103, %c0_104, %c0_105] : memref<2x64x32xf32, #tpu.memory_space<vmem>>, vector<1x64x32xf32>
    %260 = vector.shape_cast %259 : vector<1x64x32xf32> to vector<64x32xf32>
    %cst_106 = arith.constant dense<0.000000e+00> : vector<16x32xf32>
    %261 = tpu.matmul %258, %260, %cst_106 {dimension_numbers = #tpu.dot_dimension_numbers<[1], [0], [0], [1], [0, 0, 1, 1], [], []>} : vector<16x64xf32>, vector<64x32xf32>, vector<16x32xf32> -> vector<16x32xf32>
    %c1_107 = arith.constant 1 : index
    %c0_108 = arith.constant 0 : index
    %c0_109 = arith.constant 0 : index
    %262 = vector.load %arg17[%c1_107, %c0_108, %c0_109] : memref<2x1x32xf32, #tpu.memory_space<vmem>>, vector<1x1x32xf32>
    %263 = vector.shape_cast %262 : vector<1x1x32xf32> to vector<1x32xf32>
    %264 = vector.broadcast %263 : vector<1x32xf32> to vector<16x32xf32>
    %265 = arith.addf %261, %264 : vector<16x32xf32>
    %266 = arith.addf %265, %214 : vector<16x32xf32>
    %c0_110 = arith.constant 0 : index
    %c0_111 = arith.constant 0 : index
    %267 = vector.load %arg18[%c0_110, %c0_111] : memref<1x32xf32, #tpu.memory_space<vmem>>, vector<1x32xf32>
    %c0_112 = arith.constant 0 : index
    %c0_113 = arith.constant 0 : index
    %268 = vector.load %arg19[%c0_112, %c0_113] : memref<1x32xf32, #tpu.memory_space<vmem>>, vector<1x32xf32>
    %cst_114 = arith.constant dense<0.000000e+00> : vector<16xf32>
    %269 = vector.multi_reduction <add>, %266, %cst_114 [1] : vector<16x32xf32> to vector<16xf32>
    %270 = vector.shape_cast %269 : vector<16xf32> to vector<16x1xf32>
    %cst_115 = arith.constant 3.200000e+01 : f32
    %271 = vector.broadcast %cst_115 : f32 to vector<16x1xf32>
    %272 = arith.divf %270, %271 : vector<16x1xf32>
    %273 = vector.broadcast %272 : vector<16x1xf32> to vector<16x32xf32>
    %274 = arith.subf %266, %273 : vector<16x32xf32>
    %275 = arith.mulf %274, %274 : vector<16x32xf32>
    %cst_116 = arith.constant dense<0.000000e+00> : vector<16xf32>
    %276 = vector.multi_reduction <add>, %275, %cst_116 [1] : vector<16x32xf32> to vector<16xf32>
    %277 = vector.shape_cast %276 : vector<16xf32> to vector<16x1xf32>
    %cst_117 = arith.constant 3.200000e+01 : f32
    %278 = vector.broadcast %cst_117 : f32 to vector<16x1xf32>
    %279 = arith.divf %277, %278 : vector<16x1xf32>
    %cst_118 = arith.constant 9.99999997E-7 : f32
    %280 = vector.broadcast %cst_118 : f32 to vector<16x1xf32>
    %281 = arith.addf %279, %280 : vector<16x1xf32>
    %282 = math.rsqrt %281 : vector<16x1xf32>
    %283 = vector.broadcast %282 : vector<16x1xf32> to vector<16x32xf32>
    %284 = arith.mulf %274, %283 : vector<16x32xf32>
    %285 = vector.broadcast %267 : vector<1x32xf32> to vector<16x32xf32>
    %286 = arith.mulf %284, %285 : vector<16x32xf32>
    %287 = vector.broadcast %268 : vector<1x32xf32> to vector<16x32xf32>
    %288 = arith.addf %286, %287 : vector<16x32xf32>
    %c0_119 = arith.constant 0 : index
    %c0_120 = arith.constant 0 : index
    %289 = vector.load %arg20[%c0_119, %c0_120] : memref<1x32xf32, #tpu.memory_space<vmem>>, vector<1x32xf32>
    %cst_121 = arith.constant dense<0.000000e+00> : vector<1x16xf32>
    %290 = tpu.matmul %289, %288, %cst_121 {dimension_numbers = #tpu.dot_dimension_numbers<[1], [1], [0], [0], [0, 0, 1, 0], [], []>} : vector<1x32xf32>, vector<16x32xf32>, vector<1x16xf32> -> vector<1x16xf32>
    %c0_122 = arith.constant 0 : index
    %c0_123 = arith.constant 0 : index
    %291 = vector.load %arg21[%c0_122, %c0_123] : memref<1x1xf32, #tpu.memory_space<vmem>>, vector<1x1xf32>
    %292 = vector.broadcast %291 : vector<1x1xf32> to vector<1x16xf32>
    %293 = arith.addf %290, %292 : vector<1x16xf32>
    %294 = arith.negf %293 : vector<1x16xf32>
    %295 = math.exp %294 : vector<1x16xf32>
    %cst_124 = arith.constant 1.000000e+00 : f32
    %296 = vector.broadcast %cst_124 : f32 to vector<1x16xf32>
    %297 = arith.addf %296, %295 : vector<1x16xf32>
    %298 = arith.divf %296, %297 : vector<1x16xf32>
    %c0_125 = arith.constant 0 : index
    %c0_126 = arith.constant 0 : index
    %299 = vector.load %arg3[%c0_125, %c0_126] : memref<1x16xf32, #tpu.memory_space<vmem>>, vector<1x16xf32>
    %300 = arith.mulf %298, %299 : vector<1x16xf32>
    %c0_127 = arith.constant 0 : index
    %c0_128 = arith.constant 0 : index
    %301 = vector.load %arg22[%c0_127, %c0_128] : memref<1x16xf32, #tpu.memory_space<vmem>>, vector<1x16xf32>
    tpu.vector_store %arg22[%c0_127, %c0_128], %300 {strides = array<i32>} : memref<1x16xf32, #tpu.memory_space<vmem>>, vector<1x16xf32>,
    return
  }
  func.func @transform_0(%arg0: i32) -> (i32, i32) {
    %c0_i32 = arith.constant 0 : i32
    %c0_i32_0 = arith.constant 0 : i32
    %c0_i32_1 = arith.constant 0 : i32
    return %c0_i32, %c0_i32_0 : i32, i32
  }
  func.func @transform_1(%arg0: i32) -> (i32, i32) {
    %c0_i32 = arith.constant 0 : i32
    %c0_i32_0 = arith.constant 0 : i32
    %c0_i32_1 = arith.constant 0 : i32
    return %c0_i32, %c0_i32_0 : i32, i32
  }
  func.func @transform_2(%arg0: i32) -> (i32, i32) {
    %c0_i32 = arith.constant 0 : i32
    %c0_i32_0 = arith.constant 0 : i32
    %c0_i32_1 = arith.constant 0 : i32
    return %c0_i32, %c0_i32_0 : i32, i32
  }
  func.func @transform_3(%arg0: i32) -> (i32, i32) {
    %c0_i32 = arith.constant 0 : i32
    %c0_i32_0 = arith.constant 0 : i32
    %c0_i32_1 = arith.constant 0 : i32
    return %c0_i32, %c0_i32_0 : i32, i32
  }
  func.func @transform_4(%arg0: i32) -> (i32, i32) {
    %c0_i32 = arith.constant 0 : i32
    %c0_i32_0 = arith.constant 0 : i32
    %c0_i32_1 = arith.constant 0 : i32
    return %c0_i32, %c0_i32_0 : i32, i32
  }
  func.func @transform_5(%arg0: i32) -> (i32, i32, i32) {
    %c0_i32 = arith.constant 0 : i32
    %c0_i32_0 = arith.constant 0 : i32
    %c0_i32_1 = arith.constant 0 : i32
    %c0_i32_2 = arith.constant 0 : i32
    return %c0_i32, %c0_i32_0, %c0_i32_1 : i32, i32, i32
  }
  func.func @transform_6(%arg0: i32) -> (i32, i32, i32) {
    %c0_i32 = arith.constant 0 : i32
    %c0_i32_0 = arith.constant 0 : i32
    %c0_i32_1 = arith.constant 0 : i32
    %c0_i32_2 = arith.constant 0 : i32
    return %c0_i32, %c0_i32_0, %c0_i32_1 : i32, i32, i32
  }
  func.func @transform_7(%arg0: i32) -> (i32, i32, i32) {
    %c0_i32 = arith.constant 0 : i32
    %c0_i32_0 = arith.constant 0 : i32
    %c0_i32_1 = arith.constant 0 : i32
    %c0_i32_2 = arith.constant 0 : i32
    return %c0_i32, %c0_i32_0, %c0_i32_1 : i32, i32, i32
  }
  func.func @transform_8(%arg0: i32) -> (i32, i32, i32) {
    %c0_i32 = arith.constant 0 : i32
    %c0_i32_0 = arith.constant 0 : i32
    %c0_i32_1 = arith.constant 0 : i32
    %c0_i32_2 = arith.constant 0 : i32
    return %c0_i32, %c0_i32_0, %c0_i32_1 : i32, i32, i32
  }
  func.func @transform_9(%arg0: i32) -> (i32, i32, i32) {
    %c0_i32 = arith.constant 0 : i32
    %c0_i32_0 = arith.constant 0 : i32
    %c0_i32_1 = arith.constant 0 : i32
    %c0_i32_2 = arith.constant 0 : i32
    return %c0_i32, %c0_i32_0, %c0_i32_1 : i32, i32, i32
  }
  func.func @transform_10(%arg0: i32) -> (i32, i32, i32) {
    %c0_i32 = arith.constant 0 : i32
    %c0_i32_0 = arith.constant 0 : i32
    %c0_i32_1 = arith.constant 0 : i32
    %c0_i32_2 = arith.constant 0 : i32
    return %c0_i32, %c0_i32_0, %c0_i32_1 : i32, i32, i32
  }
  func.func @transform_11(%arg0: i32) -> (i32, i32, i32) {
    %c0_i32 = arith.constant 0 : i32
    %c0_i32_0 = arith.constant 0 : i32
    %c0_i32_1 = arith.constant 0 : i32
    %c0_i32_2 = arith.constant 0 : i32
    return %c0_i32, %c0_i32_0, %c0_i32_1 : i32, i32, i32
  }
  func.func @transform_12(%arg0: i32) -> (i32, i32, i32) {
    %c0_i32 = arith.constant 0 : i32
    %c0_i32_0 = arith.constant 0 : i32
    %c0_i32_1 = arith.constant 0 : i32
    %c0_i32_2 = arith.constant 0 : i32
    return %c0_i32, %c0_i32_0, %c0_i32_1 : i32, i32, i32
  }
  func.func @transform_13(%arg0: i32) -> (i32, i32, i32) {
    %c0_i32 = arith.constant 0 : i32
    %c0_i32_0 = arith.constant 0 : i32
    %c0_i32_1 = arith.constant 0 : i32
    %c0_i32_2 = arith.constant 0 : i32
    return %c0_i32, %c0_i32_0, %c0_i32_1 : i32, i32, i32
  }
  func.func @transform_14(%arg0: i32) -> (i32, i32, i32) {
    %c0_i32 = arith.constant 0 : i32
    %c0_i32_0 = arith.constant 0 : i32
    %c0_i32_1 = arith.constant 0 : i32
    %c0_i32_2 = arith.constant 0 : i32
    return %c0_i32, %c0_i32_0, %c0_i32_1 : i32, i32, i32
  }
  func.func @transform_15(%arg0: i32) -> (i32, i32, i32) {
    %c0_i32 = arith.constant 0 : i32
    %c0_i32_0 = arith.constant 0 : i32
    %c0_i32_1 = arith.constant 0 : i32
    %c0_i32_2 = arith.constant 0 : i32
    return %c0_i32, %c0_i32_0, %c0_i32_1 : i32, i32, i32
  }
  func.func @transform_16(%arg0: i32) -> (i32, i32, i32) {
    %c0_i32 = arith.constant 0 : i32
    %c0_i32_0 = arith.constant 0 : i32
    %c0_i32_1 = arith.constant 0 : i32
    %c0_i32_2 = arith.constant 0 : i32
    return %c0_i32, %c0_i32_0, %c0_i32_1 : i32, i32, i32
  }
  func.func @transform_17(%arg0: i32) -> (i32, i32) {
    %c0_i32 = arith.constant 0 : i32
    %c0_i32_0 = arith.constant 0 : i32
    %c0_i32_1 = arith.constant 0 : i32
    return %c0_i32, %c0_i32_0 : i32, i32
  }
  func.func @transform_18(%arg0: i32) -> (i32, i32) {
    %c0_i32 = arith.constant 0 : i32
    %c0_i32_0 = arith.constant 0 : i32
    %c0_i32_1 = arith.constant 0 : i32
    return %c0_i32, %c0_i32_0 : i32, i32
  }
  func.func @transform_19(%arg0: i32) -> (i32, i32) {
    %c0_i32 = arith.constant 0 : i32
    %c0_i32_0 = arith.constant 0 : i32
    %c0_i32_1 = arith.constant 0 : i32
    return %c0_i32, %c0_i32_0 : i32, i32
  }
  func.func @transform_20(%arg0: i32) -> (i32, i32) {
    %c0_i32 = arith.constant 0 : i32
    %c0_i32_0 = arith.constant 0 : i32
    %c0_i32_1 = arith.constant 0 : i32
    return %c0_i32, %c0_i32_0 : i32, i32
  }
  func.func @transform_21(%arg0: i32) -> (i32, i32) {
    %c0_i32 = arith.constant 0 : i32
    %c0_i32_0 = arith.constant 0 : i32
    %c0_i32_1 = arith.constant 0 : i32
    return %c0_i32, %c0_i32_0 : i32, i32
  }
}

</mosaic_0001>

<llo_original>
// kernel: ext_transformer_encoder.1
$region0: #{ext_transformer_encoder.1}
  #allocation0 [shape = 'u32[]', space=smem, size = 0x4, offset = 0x4, fixed_abs, tag = 'smem constant byte address 0x4 - core index']
  #allocation1 [shape = 'u32[144,128]{1,0:T(1,128)}', space=vmem, size = 0x12000, scoped, tag = 'internal scratch']
  #allocation2 [shape = 'f32[1,1]{1,0:T(1,128)S(1)}', space=vmem, size = 0x200, scoped, tag = 'scoped memory for ext_transformer_encoder.1']
  %s0 = inlined_call_operand.vmem [shape: f32[16,32], index: 0, kind: input, shape index: {}]
  %s1 = inlined_call_operand.vmem [shape: f32[16,1], index: 1, kind: input, shape index: {}]
  %s2 = inlined_call_operand.vmem [shape: f32[1,16], index: 2, kind: input, shape index: {}]
  %s3 = inlined_call_operand.vmem [shape: f32[16,32], index: 3, kind: input, shape index: {}]
  %s4 = inlined_call_operand.vmem [shape: f32[64,64], index: 4, kind: input, shape index: {}]
  %s5 = inlined_call_operand.vmem [shape: f32[2,1,32], index: 5, kind: input, shape index: {}]
  %s6 = inlined_call_operand.vmem [shape: f32[2,1,32], index: 6, kind: input, shape index: {}]
  %s7 = inlined_call_operand.vmem [shape: f32[2,32,96], index: 7, kind: input, shape index: {}]
  %s8 = inlined_call_operand.vmem [shape: f32[2,1,96], index: 8, kind: input, shape index: {}]
  %s9 = inlined_call_operand.vmem [shape: f32[2,32,32], index: 9, kind: input, shape index: {}]
  %s10 = inlined_call_operand.vmem [shape: f32[2,1,32], index: 10, kind: input, shape index: {}]
  %s11 = inlined_call_operand.vmem [shape: f32[2,1,32], index: 11, kind: input, shape index: {}]
  %s12 = inlined_call_operand.vmem [shape: f32[2,1,32], index: 12, kind: input, shape index: {}]
  %s13 = inlined_call_operand.vmem [shape: f32[2,32,64], index: 13, kind: input, shape index: {}]
  %s14 = inlined_call_operand.vmem [shape: f32[2,1,64], index: 14, kind: input, shape index: {}]
  %s15 = inlined_call_operand.vmem [shape: f32[2,64,32], index: 15, kind: input, shape index: {}]
  %s16 = inlined_call_operand.vmem [shape: f32[2,1,32], index: 16, kind: input, shape index: {}]
  %s17 = inlined_call_operand.vmem [shape: f32[1,32], index: 17, kind: input, shape index: {}]
  %s18 = inlined_call_operand.vmem [shape: f32[1,32], index: 18, kind: input, shape index: {}]
  %s19 = inlined_call_operand.vmem [shape: f32[1,32], index: 19, kind: input, shape index: {}]
  %s20 = inlined_call_operand.<no memory space> [shape: f32[1,1], index: 20, kind: input, shape index: {}]
  %s21 = inlined_call_operand.vmem [shape: f32[1,16], index: 21, kind: output, shape index: {}]
  %s22 = sld [smem:[#allocation0]]
  $region94: #{ext_transformer_encoder.1} parent=0
    _
  %s24 = ssub.s32 1, %s22
  %s25 = scalar_select 0, %s24, %s22
  %v26 = vstv %s20
  %27 = vst [vmem:[#allocation2] sm:$0x1] %v26
  // Predicated region
  $region2: #{ext_transformer_encoder.1} parent=0 // pred_check
    _
  $region3: #{ext_transformer_encoder.1} parent=0 // pred_check_branch
    %29 = sbr.rel (0) target = $region5
  $region4: #{ext_transformer_encoder.1} parent=0 // pred_region
    _
  $region5: #{ext_transformer_encoder.1} parent=0 // pred_fallthru
    _
  // Predicated region
  $region6: #{ext_transformer_encoder.1} parent=0 // pred_check
    _
  $region7: #{ext_transformer_encoder.1} parent=0 // pred_check_branch
    %31 = sbr.rel (0) target = $region9
  $region8: #{ext_transformer_encoder.1} parent=0 // pred_region
    _
  $region9: #{ext_transformer_encoder.1} parent=0 // pred_fallthru
    _
  // Predicated region
  $region10: #{ext_transformer_encoder.1} parent=0 // pred_check
    _
  $region11: #{ext_transformer_encoder.1} parent=0 // pred_check_branch
    %33 = sbr.rel (0) target = $region13
  $region12: #{ext_transformer_encoder.1} parent=0 // pred_region
    _
  $region13: #{ext_transformer_encoder.1} parent=0 // pred_fallthru
    _
  // Predicated region
  $region14: #{ext_transformer_encoder.1} parent=0 // pred_check
    _
  $region15: #{ext_transformer_encoder.1} parent=0 // pred_check_branch
    %35 = sbr.rel (0) target = $region17
  $region16: #{ext_transformer_encoder.1} parent=0 // pred_region
    _
  $region17: #{ext_transformer_encoder.1} parent=0 // pred_fallthru
    _
  // Predicated region
  $region18: #{ext_transformer_encoder.1} parent=0 // pred_check
    _
  $region19: #{ext_transformer_encoder.1} parent=0 // pred_check_branch
    %37 = sbr.rel (0) target = $region21
  $region20: #{ext_transformer_encoder.1} parent=0 // pred_region
    _
  $region21: #{ext_transformer_encoder.1} parent=0 // pred_fallthru
    _
  // Predicated region
  $region22: #{ext_transformer_encoder.1} parent=0 // pred_check
    _
  $region23: #{ext_transformer_encoder.1} parent=0 // pred_check_branch
    %39 = sbr.rel (0) target = $region25
  $region24: #{ext_transformer_encoder.1} parent=0 // pred_region
    _
  $region25: #{ext_transformer_encoder.1} parent=0 // pred_fallthru
    _
  // Predicated region
  $region26: #{ext_transformer_encoder.1} parent=0 // pred_check
    _
  $region27: #{ext_transformer_encoder.1} parent=0 // pred_check_branch
    %41 = sbr.rel (0) target = $region29
  $region28: #{ext_transformer_encoder.1} parent=0 // pred_region
    _
  $region29: #{ext_transformer_encoder.1} parent=0 // pred_fallthru
    _
  // Predicated region
  $region30: #{ext_transformer_encoder.1} parent=0 // pred_check
    _
  $region31: #{ext_transformer_encoder.1} parent=0 // pred_check_branch
    %43 = sbr.rel (0) target = $region33
  $region32: #{ext_transformer_encoder.1} parent=0 // pred_region
    _
  $region33: #{ext_transformer_encoder.1} parent=0 // pred_fallthru
    _
  // Predicated region
  $region34: #{ext_transformer_encoder.1} parent=0 // pred_check
    _
  $region35: #{ext_transformer_encoder.1} parent=0 // pred_check_branch
    %45 = sbr.rel (0) target = $region37
  $region36: #{ext_transformer_encoder.1} parent=0 // pred_region
    _
  $region37: #{ext_transformer_encoder.1} parent=0 // pred_fallthru
    _
  // Predicated region
  $region38: #{ext_transformer_encoder.1} parent=0 // pred_check
    _
  $region39: #{ext_transformer_encoder.1} parent=0 // pred_check_branch
    %47 = sbr.rel (0) target = $region41
  $region40: #{ext_transformer_encoder.1} parent=0 // pred_region
    _
  $region41: #{ext_transformer_encoder.1} parent=0 // pred_fallthru
    _
  // Predicated region
  $region42: #{ext_transformer_encoder.1} parent=0 // pred_check
    _
  $region43: #{ext_transformer_encoder.1} parent=0 // pred_check_branch
    %49 = sbr.rel (0) target = $region45
  $region44: #{ext_transformer_encoder.1} parent=0 // pred_region
    _
  $region45: #{ext_transformer_encoder.1} parent=0 // pred_fallthru
    _
  // Predicated region
  $region46: #{ext_transformer_encoder.1} parent=0 // pred_check
    _
  $region47: #{ext_transformer_encoder.1} parent=0 // pred_check_branch
    %51 = sbr.rel (0) target = $region49
  $region48: #{ext_transformer_encoder.1} parent=0 // pred_region
    _
  $region49: #{ext_transformer_encoder.1} parent=0 // pred_fallthru
    _
  // Predicated region
  $region50: #{ext_transformer_encoder.1} parent=0 // pred_check
    _
  $region51: #{ext_transformer_encoder.1} parent=0 // pred_check_branch
    %53 = sbr.rel (0) target = $region53
  $region52: #{ext_transformer_encoder.1} parent=0 // pred_region
    _
  $region53: #{ext_transformer_encoder.1} parent=0 // pred_fallthru
    _
  // Predicated region
  $region54: #{ext_transformer_encoder.1} parent=0 // pred_check
    _
  $region55: #{ext_transformer_encoder.1} parent=0 // pred_check_branch
    %55 = sbr.rel (0) target = $region57
  $region56: #{ext_transformer_encoder.1} parent=0 // pred_region
    _
  $region57: #{ext_transformer_encoder.1} parent=0 // pred_fallthru
    _
  // Predicated region
  $region58: #{ext_transformer_encoder.1} parent=0 // pred_check
    _
  $region59: #{ext_transformer_encoder.1} parent=0 // pred_check_branch
    %57 = sbr.rel (0) target = $region61
  $region60: #{ext_transformer_encoder.1} parent=0 // pred_region
    _
  $region61: #{ext_transformer_encoder.1} parent=0 // pred_fallthru
    _
  // Predicated region
  $region62: #{ext_transformer_encoder.1} parent=0 // pred_check
    _
  $region63: #{ext_transformer_encoder.1} parent=0 // pred_check_branch
    %59 = sbr.rel (0) target = $region65
  $region64: #{ext_transformer_encoder.1} parent=0 // pred_region
    _
  $region65: #{ext_transformer_encoder.1} parent=0 // pred_fallthru
    _
  // Predicated region
  $region66: #{ext_transformer_encoder.1} parent=0 // pred_check
    _
  $region67: #{ext_transformer_encoder.1} parent=0 // pred_check_branch
    %61 = sbr.rel (0) target = $region69
  $region68: #{ext_transformer_encoder.1} parent=0 // pred_region
    _
  $region69: #{ext_transformer_encoder.1} parent=0 // pred_fallthru
    _
  // Predicated region
  $region70: #{ext_transformer_encoder.1} parent=0 // pred_check
    _
  $region71: #{ext_transformer_encoder.1} parent=0 // pred_check_branch
    %63 = sbr.rel (0) target = $region73
  $region72: #{ext_transformer_encoder.1} parent=0 // pred_region
    _
  $region73: #{ext_transformer_encoder.1} parent=0 // pred_fallthru
    _
  // Predicated region
  $region74: #{ext_transformer_encoder.1} parent=0 // pred_check
    _
  $region75: #{ext_transformer_encoder.1} parent=0 // pred_check_branch
    %65 = sbr.rel (0) target = $region77
  $region76: #{ext_transformer_encoder.1} parent=0 // pred_region
    _
  $region77: #{ext_transformer_encoder.1} parent=0 // pred_fallthru
    _
  // Predicated region
  $region78: #{ext_transformer_encoder.1} parent=0 // pred_check
    _
  $region79: #{ext_transformer_encoder.1} parent=0 // pred_check_branch
    %67 = sbr.rel (0) target = $region81
  $region80: #{ext_transformer_encoder.1} parent=0 // pred_region
    _
  $region81: #{ext_transformer_encoder.1} parent=0 // pred_fallthru
    _
  // Predicated region
  $region82: #{ext_transformer_encoder.1} parent=0 // pred_check
    _
  $region83: #{ext_transformer_encoder.1} parent=0 // pred_check_branch
    %69 = sbr.rel (0) target = $region85
  $region84: #{ext_transformer_encoder.1} parent=0 // pred_region
    _
  $region85: #{ext_transformer_encoder.1} parent=0 // pred_fallthru
    _
  %v70 = vld [vmem:[%s0] sm:$0xff]
  %v71 = vld [vmem:[%s0 + $0x8] sm:$0xff]
  %v72 = vld [vmem:[%s1] sm:$0xff]
  %v73 = vld [vmem:[%s1 + $0x8] sm:$0xff]
  %75 = vset.pattern.permute.xlu0 0
  %76 = vperm.xlu0 %75, %v72
  %v77 = vpop.permute.xlu0 %76
  %80 = vset.pattern.permute.xlu0 0
  %81 = vperm.xlu0 %80, %v73
  %v82 = vpop.permute.xlu0 %81
  %v84 = vmul.f32 %v70, %v77
  %v85 = vmul.f32 %v71, %v82
  %v86 = vld [vmem:[%s3] sm:$0xff]
  %v87 = vld [vmem:[%s3 + $0x8] sm:$0xff]
  %v88 = vadd.f32 %v84, %v86
  %v89 = vadd.f32 %v85, %v87
  %v90 = vld [vmem:[%s4] sm:$0xff]
  %v91 = vld [vmem:[%s4 + $0x8] sm:$0xff]
  %v92 = vld [vmem:[%s4 + $0x10] sm:$0xff]
  %v93 = vld [vmem:[%s4 + $0x18] sm:$0xff]
  %v94 = vld [vmem:[%s4 + $0x20] sm:$0xff]
  %v95 = vld [vmem:[%s4 + $0x28] sm:$0xff]
  %v96 = vld [vmem:[%s4 + $0x30] sm:$0xff]
  %v97 = vld [vmem:[%s4 + $0x38] sm:$0xff]
  %v98 = vld [vmem:[%s7] sm:$0xff]
  %v99 = vld [vmem:[%s7 + $0x8] sm:$0xff]
  %v100 = vld [vmem:[%s7 + $0x10] sm:$0xff]
  %v101 = vld [vmem:[%s7 + $0x18] sm:$0xff]
  %v102 = vld [vmem:[%s8] sm:$0x1]
  %v104 = vlaneseq
  %v105 = vshrl.u32 %v104, 7
  %v106 = vsub.s32 0, %v105
  %v107 = vrot.slane %v102, %v106
  %vm109 = vcmask 261120
  %v111 = vsel %vm109, %v88, 0
  %v114 = vsel %vm109, %v89, 0
  %116 = vmatprep.subr.mxu0 0.0
  %117 = vmatpush1.msra.mxu0 %v98
  %118 = vmatprep.subr.mxu0 0.0
  %119 = vmatpush1.msra.mxu0 %v99
  %120 = vmatprep.subr.mxu0 0.0
  %121 = vmatpush1.msra.mxu0 %v100
  %122 = vmatprep.subr.mxu0 0.0
  %123 = vmatpush1.msra.mxu0 %v101
  %124 = vmatprep.subr.mxu0 0.0
  %125 = vmatpush1.msra.mxu0 0.0
  %126 = vmatprep.subr.mxu0 0.0
  %127 = vmatpush1.msra.mxu0 0.0
  %128 = vmatprep.subr.mxu0 0.0
  %129 = vmatpush1.msra.mxu0 0.0
  %130 = vmatprep.subr.mxu0 0.0
  %131 = vmatpush1.msra.mxu0 0.0
  %132 = vmatprep.subr.mxu0 0.0
  %133 = vmatpush1.msra.mxu0 0.0
  %134 = vmatprep.subr.mxu0 0.0
  %135 = vmatpush1.msra.mxu0 0.0
  %136 = vmatprep.subr.mxu0 0.0
  %137 = vmatpush1.msra.mxu0 0.0
  %138 = vmatprep.subr.mxu0 0.0
  %139 = vmatpush1.msra.mxu0 0.0
  %140 = vmatprep.subr.mxu0 0.0
  %141 = vmatpush1.msra.mxu0 0.0
  %142 = vmatprep.subr.mxu0 0.0
  %143 = vmatpush1.msra.mxu0 0.0
  %144 = vmatprep.subr.mxu0 0.0
  %145 = vmatpush1.msra.mxu0 0.0
  %146 = vmatprep.subr.mxu0 0.0
  %147 = vmatpush1.msra.mxu0 0.0
  %148 = vmatprep.subr.mxu0 0.0
  %149 = vmatpush1.msra.mxu0 0.0
  %150 = vmatprep.subr.mxu0 0.0
  %151 = vmatpush1.msra.mxu0 0.0
  %152 = vmatprep.subr.mxu0 0.0
  %153 = vmatpush1.msra.mxu0 0.0
  %154 = vmatprep.subr.mxu0 0.0
  %155 = vmatpush1.msra.mxu0 0.0
  %156 = vmatprep.subr.mxu0 0.0
  %157 = vmatpush1.msra.mxu0 0.0
  %158 = vmatprep.subr.mxu0 0.0
  %159 = vmatpush1.msra.mxu0 0.0
  %160 = vmatprep.subr.mxu0 0.0
  %161 = vmatpush1.msra.mxu0 0.0
  %162 = vmatprep.subr.mxu0 0.0
  %163 = vmatpush1.msra.mxu0 0.0
  %164 = vmatprep.subr.mxu0 0.0
  %165 = vmatpush1.msra.mxu0 0.0
  %166 = vmatprep.subr.mxu0 0.0
  %167 = vmatpush1.msra.mxu0 0.0
  %168 = vmatprep.subr.mxu0 0.0
  %169 = vmatpush1.msra.mxu0 0.0
  %170 = vmatprep.subr.mxu0 0.0
  %171 = vmatpush1.msra.mxu0 0.0
  %172 = vmatprep.subr.mxu0 0.0
  %173 = vmatpush1.msra.mxu0 0.0
  %174 = vmatprep.subr.mxu0 0.0
  %175 = vmatpush1.msra.mxu0 0.0
  %176 = vmatprep.subr.mxu0 0.0
  %177 = vmatpush1.msra.mxu0 0.0
  %178 = vmatprep.subr.mxu0 0.0
  %179 = vmatpush1.msra.mxu0 0.0
  %180 = vmatprep.mubr.f32.mxu0 0.0
  %181 = vmatmul.mubr.f32.gmra.mrb[0].mxu0 %v111
  %v182 = vpop.f32.mrb[0].mxu0
  %v183 = vadd.f32 %v107, %v182
  %v184 = vpop.f32.mrb[0].mxu0
  %185 = vmatprep.mubr.f32.mxu0 0.0
  %186 = vmatmul.mubr.f32.gmra.mrb[0].mxu0 %v114
  %v187 = vpop.f32.mrb[0].mxu0
  %v188 = vadd.f32 %v107, %v187
  %v189 = vpop.f32.mrb[0].mxu0
  %190 = vdwg.mxu0
  %192 = vrot.lane.b32.xlu0 %v183, 120
  %v193 = vpop.permute.xlu0 %192
  %194 = vrot.lane.b32.xlu0 %v183, 112
  %v195 = vpop.permute.xlu0 %194
  %196 = vrot.lane.b32.xlu0 %v183, 104
  %v197 = vpop.permute.xlu0 %196
  %199 = vrot.lane.b32.xlu0 %v188, 120
  %v200 = vpop.permute.xlu0 %199
  %201 = vrot.lane.b32.xlu0 %v188, 112
  %v202 = vpop.permute.xlu0 %201
  %203 = vrot.lane.b32.xlu0 %v188, 104
  %v204 = vpop.permute.xlu0 %203
  %205 = vrot.lane.b32.xlu0 %v183, 96
  %v206 = vpop.permute.xlu0 %205
  %207 = vrot.lane.b32.xlu0 %v193, 96
  %v208 = vpop.permute.xlu0 %207
  %209 = vrot.lane.b32.xlu0 %v195, 96
  %v210 = vpop.permute.xlu0 %209
  %211 = vrot.lane.b32.xlu0 %v197, 96
  %v212 = vpop.permute.xlu0 %211
  %213 = vrot.lane.b32.xlu0 %v188, 96
  %v214 = vpop.permute.xlu0 %213
  %215 = vrot.lane.b32.xlu0 %v200, 96
  %v216 = vpop.permute.xlu0 %215
  %217 = vrot.lane.b32.xlu0 %v202, 96
  %v218 = vpop.permute.xlu0 %217
  %219 = vrot.lane.b32.xlu0 %v204, 96
  %v220 = vpop.permute.xlu0 %219
  %vm221 = vcmask 64512
  %v222 = vsel %vm221, %v183, 0
  %v224 = vsel %vm221, %v193, 0
  %v226 = vsel %vm221, %v195, 0
  %v228 = vsel %vm221, %v197, 0
  %v230 = vsel %vm221, %v188, 0
  %v232 = vsel %vm221, %v200, 0
  %v234 = vsel %vm221, %v202, 0
  %v236 = vsel %vm221, %v204, 0
  %v238 = vsel %vm221, %v206, 0
  %v240 = vsel %vm221, %v208, 0
  %v242 = vsel %vm221, %v210, 0
  %v244 = vsel %vm221, %v212, 0
  %v246 = vsel %vm221, %v214, 0
  %v248 = vsel %vm221, %v216, 0
  %v250 = vsel %vm221, %v218, 0
  %v252 = vsel %vm221, %v220, 0
  %254 = vmatprep.subr.mxu0 0.0
  %255 = vmatpush1.xpose.msra.mxu0 %v238
  %256 = vmatprep.subr.mxu0 0.0
  %257 = vmatpush1.xpose.msra.mxu0 %v240
  %258 = vmatprep.subr.mxu0 0.0
  %259 = vmatpush1.xpose.msra.mxu0 %v242
  %260 = vmatprep.subr.mxu0 0.0
  %261 = vmatpush1.xpose.msra.mxu0 %v244
  %262 = vmatprep.subr.mxu0 0.0
  %263 = vmatpush1.xpose.msra.mxu0 %v246
  %264 = vmatprep.subr.mxu0 0.0
  %265 = vmatpush1.xpose.msra.mxu0 %v248
  %266 = vmatprep.subr.mxu0 0.0
  %267 = vmatpush1.xpose.msra.mxu0 %v250
  %268 = vmatprep.subr.mxu0 0.0
  %269 = vmatpush1.xpose.msra.mxu0 %v252
  %270 = vmatprep.subr.mxu0 0.0
  %271 = vmatpush1.xpose.msra.mxu0 0.0
  %272 = vmatprep.subr.mxu0 0.0
  %273 = vmatpush1.xpose.msra.mxu0 0.0
  %274 = vmatprep.subr.mxu0 0.0
  %275 = vmatpush1.xpose.msra.mxu0 0.0
  %276 = vmatprep.subr.mxu0 0.0
  %277 = vmatpush1.xpose.msra.mxu0 0.0
  %278 = vmatprep.subr.mxu0 0.0
  %279 = vmatpush1.xpose.msra.mxu0 0.0
  %280 = vmatprep.subr.mxu0 0.0
  %281 = vmatpush1.xpose.msra.mxu0 0.0
  %282 = vmatprep.subr.mxu0 0.0
  %283 = vmatpush1.xpose.msra.mxu0 0.0
  %284 = vmatprep.subr.mxu0 0.0
  %285 = vmatpush1.xpose.msra.mxu0 0.0
  %286 = vmatprep.subr.mxu0 0.0
  %287 = vmatpush1.xpose.msra.mxu0 0.0
  %288 = vmatprep.subr.mxu0 0.0
  %289 = vmatpush1.xpose.msra.mxu0 0.0
  %290 = vmatprep.subr.mxu0 0.0
  %291 = vmatpush1.xpose.msra.mxu0 0.0
  %292 = vmatprep.subr.mxu0 0.0
  %293 = vmatpush1.xpose.msra.mxu0 0.0
  %294 = vmatprep.subr.mxu0 0.0
  %295 = vmatpush1.xpose.msra.mxu0 0.0
  %296 = vmatprep.subr.mxu0 0.0
  %297 = vmatpush1.xpose.msra.mxu0 0.0
  %298 = vmatprep.subr.mxu0 0.0
  %299 = vmatpush1.xpose.msra.mxu0 0.0
  %300 = vmatprep.subr.mxu0 0.0
  %301 = vmatpush1.xpose.msra.mxu0 0.0
  %302 = vmatprep.subr.mxu0 0.0
  %303 = vmatpush1.xpose.msra.mxu0 0.0
  %304 = vmatprep.subr.mxu0 0.0
  %305 = vmatpush1.xpose.msra.mxu0 0.0
  %306 = vmatprep.subr.mxu0 0.0
  %307 = vmatpush1.xpose.msra.mxu0 0.0
  %308 = vmatprep.subr.mxu0 0.0
  %309 = vmatpush1.xpose.msra.mxu0 0.0
  %310 = vmatprep.subr.mxu0 0.0
  %311 = vmatpush1.xpose.msra.mxu0 0.0
  %312 = vmatprep.subr.mxu0 0.0
  %313 = vmatpush1.xpose.msra.mxu0 0.0
  %314 = vmatprep.subr.mxu0 0.0
  %315 = vmatpush1.xpose.msra.mxu0 0.0
  %316 = vmatprep.subr.mxu0 0.0
  %317 = vmatpush1.xpose.msra.mxu0 0.0
  %318 = vmatprep.mubr.f32.mxu0 0.0
  %319 = vmatmul.mubr.f32.gmra.mrb[0].mxu0 %v222
  %v320 = vpop.f32.mrb[0].mxu0
  %v321 = vadd.f32 %v90, %v320
  %v322 = vpop.f32.mrb[0].mxu0
  %323 = vmatprep.mubr.f32.mxu0 0.0
  %324 = vmatmul.mubr.f32.gmra.mrb[0].mxu0 %v224
  %v325 = vpop.f32.mrb[0].mxu0
  %v326 = vadd.f32 %v91, %v325
  %v327 = vpop.f32.mrb[0].mxu0
  %328 = vmatprep.mubr.f32.mxu0 0.0
  %329 = vmatmul.mubr.f32.gmra.mrb[0].mxu0 %v226
  %v330 = vpop.f32.mrb[0].mxu0
  %v331 = vadd.f32 %v92, %v330
  %v332 = vpop.f32.mrb[0].mxu0
  %333 = vmatprep.mubr.f32.mxu0 0.0
  %334 = vmatmul.mubr.f32.gmra.mrb[0].mxu0 %v228
  %v335 = vpop.f32.mrb[0].mxu0
  %v336 = vadd.f32 %v93, %v335
  %v337 = vpop.f32.mrb[0].mxu0
  %338 = vmatprep.mubr.f32.mxu0 0.0
  %339 = vmatmul.mubr.f32.gmra.mrb[0].mxu0 %v230
  %v340 = vpop.f32.mrb[0].mxu0
  %v341 = vadd.f32 %v94, %v340
  %v342 = vpop.f32.mrb[0].mxu0
  %343 = vmatprep.mubr.f32.mxu0 0.0
  %344 = vmatmul.mubr.f32.gmra.mrb[0].mxu0 %v232
  %v345 = vpop.f32.mrb[0].mxu0
  %v346 = vadd.f32 %v95, %v345
  %v347 = vpop.f32.mrb[0].mxu0
  %348 = vmatprep.mubr.f32.mxu0 0.0
  %349 = vmatmul.mubr.f32.gmra.mrb[0].mxu0 %v234
  %v350 = vpop.f32.mrb[0].mxu0
  %v351 = vadd.f32 %v96, %v350
  %v352 = vpop.f32.mrb[0].mxu0
  %353 = vmatprep.mubr.f32.mxu0 0.0
  %354 = vmatmul.mubr.f32.gmra.mrb[0].mxu0 %v236
  %v355 = vpop.f32.mrb[0].mxu0
  %v356 = vadd.f32 %v97, %v355
  %v357 = vpop.f32.mrb[0].mxu0
  %358 = vdwg.mxu0
  %vm359 = vcmask 523264
  %v360 = vsel %vm359, %v321, -inf
  %361 = vmax.xlane.f32.xlu0 %v360
  %v362 = vpop.xlane.xlu0 %361
  %v363 = vsel %vm359, %v326, -inf
  %364 = vmax.xlane.f32.xlu0 %v363
  %v365 = vpop.xlane.xlu0 %364
  %v366 = vsel %vm359, %v331, -inf
  %367 = vmax.xlane.f32.xlu0 %v366
  %v368 = vpop.xlane.xlu0 %367
  %v369 = vsel %vm359, %v336, -inf
  %370 = vmax.xlane.f32.xlu0 %v369
  %v371 = vpop.xlane.xlu0 %370
  %v372 = vsel %vm359, %v341, -inf
  %373 = vmax.xlane.f32.xlu0 %v372
  %v374 = vpop.xlane.xlu0 %373
  %v375 = vsel %vm359, %v346, -inf
  %376 = vmax.xlane.f32.xlu0 %v375
  %v377 = vpop.xlane.xlu0 %376
  %v378 = vsel %vm359, %v351, -inf
  %379 = vmax.xlane.f32.xlu0 %v378
  %v380 = vpop.xlane.xlu0 %379
  %v381 = vsel %vm359, %v356, -inf
  %382 = vmax.xlane.f32.xlu0 %v381
  %v383 = vpop.xlane.xlu0 %382
  %v384 = vsub.f32 %v321, %v362
  %v385 = vsub.f32 %v326, %v365
  %v386 = vsub.f32 %v331, %v368
  %v387 = vsub.f32 %v336, %v371
  %v388 = vsub.f32 %v341, %v374
  %v389 = vsub.f32 %v346, %v377
  %v390 = vsub.f32 %v351, %v380
  %v391 = vsub.f32 %v356, %v383
  %v392 = vmul.f32 %v384, 1.442695
  %v393 = vpow.pop %v392
  %v394 = vmul.f32 %v385, 1.442695
  %v395 = vpow.pop %v394
  %v396 = vmul.f32 %v386, 1.442695
  %v397 = vpow.pop %v396
  %v398 = vmul.f32 %v387, 1.442695
  %v399 = vpow.pop %v398
  %v400 = vmul.f32 %v388, 1.442695
  %v401 = vpow.pop %v400
  %v402 = vmul.f32 %v389, 1.442695
  %v403 = vpow.pop %v402
  %v404 = vmul.f32 %v390, 1.442695
  %v405 = vpow.pop %v404
  %v406 = vmul.f32 %v391, 1.442695
  %v407 = vpow.pop %v406
  %v408 = vsel %vm359, %v393, 0.0
  %409 = vadd.xlane.f32.xlu0 %v408
  %v410 = vpop.xlane.xlu0 %409
  %v411 = vsel %vm359, %v395, 0.0
  %412 = vadd.xlane.f32.xlu0 %v411
  %v413 = vpop.xlane.xlu0 %412
  %v414 = vsel %vm359, %v397, 0.0
  %415 = vadd.xlane.f32.xlu0 %v414
  %v416 = vpop.xlane.xlu0 %415
  %v417 = vsel %vm359, %v399, 0.0
  %418 = vadd.xlane.f32.xlu0 %v417
  %v419 = vpop.xlane.xlu0 %418
  %v420 = vsel %vm359, %v401, 0.0
  %421 = vadd.xlane.f32.xlu0 %v420
  %v422 = vpop.xlane.xlu0 %421
  %v423 = vsel %vm359, %v403, 0.0
  %424 = vadd.xlane.f32.xlu0 %v423
  %v425 = vpop.xlane.xlu0 %424
  %v426 = vsel %vm359, %v405, 0.0
  %427 = vadd.xlane.f32.xlu0 %v426
  %v428 = vpop.xlane.xlu0 %427
  %v429 = vsel %vm359, %v407, 0.0
  %430 = vadd.xlane.f32.xlu0 %v429
  %v431 = vpop.xlane.xlu0 %430
  %v432 = vrcp.pop %v410
  %v433 = vrcp.pop %v413
  %v434 = vrcp.pop %v416
  %v435 = vrcp.pop %v419
  %v436 = vrcp.pop %v422
  %v437 = vrcp.pop %v425
  %v438 = vrcp.pop %v428
  %v439 = vrcp.pop %v431
  %v440 = vmul.f32 %v393, %v432
  %v441 = vmul.f32 %v395, %v433
  %v442 = vmul.f32 %v397, %v434
  %v443 = vmul.f32 %v399, %v435
  %v444 = vmul.f32 %v401, %v436
  %v445 = vmul.f32 %v403, %v437
  %v446 = vmul.f32 %v405, %v438
  %v447 = vmul.f32 %v407, %v439
  %448 = vrot.lane.b32.xlu0 %v183, 64
  %v449 = vpop.permute.xlu0 %448
  %450 = vrot.lane.b32.xlu0 %v193, 64
  %v451 = vpop.permute.xlu0 %450
  %452 = vrot.lane.b32.xlu0 %v195, 64
  %v453 = vpop.permute.xlu0 %452
  %454 = vrot.lane.b32.xlu0 %v197, 64
  %v455 = vpop.permute.xlu0 %454
  %456 = vrot.lane.b32.xlu0 %v188, 64
  %v457 = vpop.permute.xlu0 %456
  %458 = vrot.lane.b32.xlu0 %v200, 64
  %v459 = vpop.permute.xlu0 %458
  %460 = vrot.lane.b32.xlu0 %v202, 64
  %v461 = vpop.permute.xlu0 %460
  %462 = vrot.lane.b32.xlu0 %v204, 64
  %v463 = vpop.permute.xlu0 %462
  %v473 = vsel %vm359, %v440, 0
  %v476 = vsel %vm359, %v441, 0
  %v479 = vsel %vm359, %v442, 0
  %v482 = vsel %vm359, %v443, 0
  %v485 = vsel %vm359, %v444, 0
  %v488 = vsel %vm359, %v445, 0
  %v491 = vsel %vm359, %v446, 0
  %v494 = vsel %vm359, %v447, 0
  %496 = vmatprep.subr.mxu0 0.0
  %497 = vmatpush1.msra.mxu0 %v449
  %498 = vmatprep.subr.mxu0 0.0
  %499 = vmatpush1.msra.mxu0 %v451
  %500 = vmatprep.subr.mxu0 0.0
  %501 = vmatpush1.msra.mxu0 %v453
  %502 = vmatprep.subr.mxu0 0.0
  %503 = vmatpush1.msra.mxu0 %v455
  %504 = vmatprep.subr.mxu0 0.0
  %505 = vmatpush1.msra.mxu0 %v457
  %506 = vmatprep.subr.mxu0 0.0
  %507 = vmatpush1.msra.mxu0 %v459
  %508 = vmatprep.subr.mxu0 0.0
  %509 = vmatpush1.msra.mxu0 %v461
  %510 = vmatprep.subr.mxu0 0.0
  %511 = vmatpush1.msra.mxu0 %v463
  %512 = vmatprep.subr.mxu0 0.0
  %513 = vmatpush1.msra.mxu0 0.0
  %514 = vmatprep.subr.mxu0 0.0
  %515 = vmatpush1.msra.mxu0 0.0
  %516 = vmatprep.subr.mxu0 0.0
  %517 = vmatpush1.msra.mxu0 0.0
  %518 = vmatprep.subr.mxu0 0.0
  %519 = vmatpush1.msra.mxu0 0.0
  %520 = vmatprep.subr.mxu0 0.0
  %521 = vmatpush1.msra.mxu0 0.0
  %522 = vmatprep.subr.mxu0 0.0
  %523 = vmatpush1.msra.mxu0 0.0
  %524 = vmatprep.subr.mxu0 0.0
  %525 = vmatpush1.msra.mxu0 0.0
  %526 = vmatprep.subr.mxu0 0.0
  %527 = vmatpush1.msra.mxu0 0.0
  %528 = vmatprep.subr.mxu0 0.0
  %529 = vmatpush1.msra.mxu0 0.0
  %530 = vmatprep.subr.mxu0 0.0
  %531 = vmatpush1.msra.mxu0 0.0
  %532 = vmatprep.subr.mxu0 0.0
  %533 = vmatpush1.msra.mxu0 0.0
  %534 = vmatprep.subr.mxu0 0.0
  %535 = vmatpush1.msra.mxu0 0.0
  %536 = vmatprep.subr.mxu0 0.0
  %537 = vmatpush1.msra.mxu0 0.0
  %538 = vmatprep.subr.mxu0 0.0
  %539 = vmatpush1.msra.mxu0 0.0
  %540 = vmatprep.subr.mxu0 0.0
  %541 = vmatpush1.msra.mxu0 0.0
  %542 = vmatprep.subr.mxu0 0.0
  %543 = vmatpush1.msra.mxu0 0.0
  %544 = vmatprep.subr.mxu0 0.0
  %545 = vmatpush1.msra.mxu0 0.0
  %546 = vmatprep.subr.mxu0 0.0
  %547 = vmatpush1.msra.mxu0 0.0
  %548 = vmatprep.subr.mxu0 0.0
  %549 = vmatpush1.msra.mxu0 0.0
  %550 = vmatprep.subr.mxu0 0.0
  %551 = vmatpush1.msra.mxu0 0.0
  %552 = vmatprep.subr.mxu0 0.0
  %553 = vmatpush1.msra.mxu0 0.0
  %554 = vmatprep.subr.mxu0 0.0
  %555 = vmatpush1.msra.mxu0 0.0
  %556 = vmatprep.subr.mxu0 0.0
  %557 = vmatpush1.msra.mxu0 0.0
  %558 = vmatprep.subr.mxu0 0.0
  %559 = vmatpush1.msra.mxu0 0.0
  %560 = vmatprep.mubr.f32.mxu0 0.0
  %561 = vmatmul.mubr.f32.gmra.mrb[0].mxu0 %v473
  %v562 = vpop.f32.mrb[0].mxu0
  %v563 = vadd.f32 0.0, %v562
  %v564 = vpop.f32.mrb[0].mxu0
  %565 = vmatprep.mubr.f32.mxu0 0.0
  %566 = vmatmul.mubr.f32.gmra.mrb[0].mxu0 %v476
  %v567 = vpop.f32.mrb[0].mxu0
  %v568 = vadd.f32 0.0, %v567
  %v569 = vpop.f32.mrb[0].mxu0
  %570 = vmatprep.mubr.f32.mxu0 0.0
  %571 = vmatmul.mubr.f32.gmra.mrb[0].mxu0 %v479
  %v572 = vpop.f32.mrb[0].mxu0
  %v573 = vadd.f32 0.0, %v572
  %v574 = vpop.f32.mrb[0].mxu0
  %575 = vmatprep.mubr.f32.mxu0 0.0
  %576 = vmatmul.mubr.f32.gmra.mrb[0].mxu0 %v482
  %v577 = vpop.f32.mrb[0].mxu0
  %v578 = vadd.f32 0.0, %v577
  %v579 = vpop.f32.mrb[0].mxu0
  %580 = vmatprep.mubr.f32.mxu0 0.0
  %581 = vmatmul.mubr.f32.gmra.mrb[0].mxu0 %v485
  %v582 = vpop.f32.mrb[0].mxu0
  %v583 = vadd.f32 0.0, %v582
  %v584 = vpop.f32.mrb[0].mxu0
  %585 = vmatprep.mubr.f32.mxu0 0.0
  %586 = vmatmul.mubr.f32.gmra.mrb[0].mxu0 %v488
  %v587 = vpop.f32.mrb[0].mxu0
  %v588 = vadd.f32 0.0, %v587
  %v589 = vpop.f32.mrb[0].mxu0
  %590 = vmatprep.mubr.f32.mxu0 0.0
  %591 = vmatmul.mubr.f32.gmra.mrb[0].mxu0 %v491
  %v592 = vpop.f32.mrb[0].mxu0
  %v593 = vadd.f32 0.0, %v592
  %v594 = vpop.f32.mrb[0].mxu0
  %595 = vmatprep.mubr.f32.mxu0 0.0
  %596 = vmatmul.mubr.f32.gmra.mrb[0].mxu0 %v494
  %v597 = vpop.f32.mrb[0].mxu0
  %v598 = vadd.f32 0.0, %v597
  %v599 = vpop.f32.mrb[0].mxu0
  %600 = vdwg.mxu0
  %602 = vrot.lane.b32.xlu0 %v568, 8
  %v603 = vpop.permute.xlu0 %602
  %606 = vrot.lane.b32.xlu0 %v573, 16
  %v607 = vpop.permute.xlu0 %606
  %610 = vrot.lane.b32.xlu0 %v578, 24
  %v611 = vpop.permute.xlu0 %610
  %v613 = vsel %vm221, %v563, %v603
  %vm614 = vcmask 130048
  %v615 = vsel %vm614, %v613, %v607
  %vm616 = vcmask 195584
  %v617 = vsel %vm616, %v615, %v611
  %619 = vrot.lane.b32.xlu0 %v588, 8
  %v620 = vpop.permute.xlu0 %619
  %623 = vrot.lane.b32.xlu0 %v593, 16
  %v624 = vpop.permute.xlu0 %623
  %627 = vrot.lane.b32.xlu0 %v598, 24
  %v628 = vpop.permute.xlu0 %627
  %v630 = vsel %vm221, %v583, %v620
  %v631 = vsel %vm614, %v630, %v624
  %v632 = vsel %vm616, %v631, %v628
  %v633 = vld [vmem:[%s9] sm:$0xff]
  %v634 = vld [vmem:[%s9 + $0x8] sm:$0xff]
  %v635 = vld [vmem:[%s9 + $0x10] sm:$0xff]
  %v636 = vld [vmem:[%s9 + $0x18] sm:$0xff]
  %v637 = vld [vmem:[%s10] sm:$0x1]
  %v639 = vlaneseq
  %v640 = vshrl.u32 %v639, 7
  %v641 = vsub.s32 0, %v640
  %v642 = vrot.slane %v637, %v641
  %v645 = vsel %vm109, %v617, 0
  %v648 = vsel %vm109, %v632, 0
  %650 = vmatprep.subr.mxu0 0.0
  %651 = vmatpush1.msra.mxu0 %v633
  %652 = vmatprep.subr.mxu0 0.0
  %653 = vmatpush1.msra.mxu0 %v634
  %654 = vmatprep.subr.mxu0 0.0
  %655 = vmatpush1.msra.mxu0 %v635
  %656 = vmatprep.subr.mxu0 0.0
  %657 = vmatpush1.msra.mxu0 %v636
  %658 = vmatprep.subr.mxu0 0.0
  %659 = vmatpush1.msra.mxu0 0.0
  %660 = vmatprep.subr.mxu0 0.0
  %661 = vmatpush1.msra.mxu0 0.0
  %662 = vmatprep.subr.mxu0 0.0
  %663 = vmatpush1.msra.mxu0 0.0
  %664 = vmatprep.subr.mxu0 0.0
  %665 = vmatpush1.msra.mxu0 0.0
  %666 = vmatprep.subr.mxu0 0.0
  %667 = vmatpush1.msra.mxu0 0.0
  %668 = vmatprep.subr.mxu0 0.0
  %669 = vmatpush1.msra.mxu0 0.0
  %670 = vmatprep.subr.mxu0 0.0
  %671 = vmatpush1.msra.mxu0 0.0
  %672 = vmatprep.subr.mxu0 0.0
  %673 = vmatpush1.msra.mxu0 0.0
  %674 = vmatprep.subr.mxu0 0.0
  %675 = vmatpush1.msra.mxu0 0.0
  %676 = vmatprep.subr.mxu0 0.0
  %677 = vmatpush1.msra.mxu0 0.0
  %678 = vmatprep.subr.mxu0 0.0
  %679 = vmatpush1.msra.mxu0 0.0
  %680 = vmatprep.subr.mxu0 0.0
  %681 = vmatpush1.msra.mxu0 0.0
  %682 = vmatprep.subr.mxu0 0.0
  %683 = vmatpush1.msra.mxu0 0.0
  %684 = vmatprep.subr.mxu0 0.0
  %685 = vmatpush1.msra.mxu0 0.0
  %686 = vmatprep.subr.mxu0 0.0
  %687 = vmatpush1.msra.mxu0 0.0
  %688 = vmatprep.subr.mxu0 0.0
  %689 = vmatpush1.msra.mxu0 0.0
  %690 = vmatprep.subr.mxu0 0.0
  %691 = vmatpush1.msra.mxu0 0.0
  %692 = vmatprep.subr.mxu0 0.0
  %693 = vmatpush1.msra.mxu0 0.0
  %694 = vmatprep.subr.mxu0 0.0
  %695 = vmatpush1.msra.mxu0 0.0
  %696 = vmatprep.subr.mxu0 0.0
  %697 = vmatpush1.msra.mxu0 0.0
  %698 = vmatprep.subr.mxu0 0.0
  %699 = vmatpush1.msra.mxu0 0.0
  %700 = vmatprep.subr.mxu0 0.0
  %701 = vmatpush1.msra.mxu0 0.0
  %702 = vmatprep.subr.mxu0 0.0
  %703 = vmatpush1.msra.mxu0 0.0
  %704 = vmatprep.subr.mxu0 0.0
  %705 = vmatpush1.msra.mxu0 0.0
  %706 = vmatprep.subr.mxu0 0.0
  %707 = vmatpush1.msra.mxu0 0.0
  %708 = vmatprep.subr.mxu0 0.0
  %709 = vmatpush1.msra.mxu0 0.0
  %710 = vmatprep.subr.mxu0 0.0
  %711 = vmatpush1.msra.mxu0 0.0
  %712 = vmatprep.subr.mxu0 0.0
  %713 = vmatpush1.msra.mxu0 0.0
  %714 = vmatprep.mubr.f32.mxu0 0.0
  %715 = vmatmul.mubr.f32.gmra.mrb[0].mxu0 %v645
  %v716 = vpop.f32.mrb[0].mxu0
  %v717 = vadd.f32 %v642, %v716
  %v718 = vpop.f32.mrb[0].mxu0
  %719 = vmatprep.mubr.f32.mxu0 0.0
  %720 = vmatmul.mubr.f32.gmra.mrb[0].mxu0 %v648
  %v721 = vpop.f32.mrb[0].mxu0
  %v722 = vadd.f32 %v642, %v721
  %v723 = vpop.f32.mrb[0].mxu0
  %724 = vdwg.mxu0
  %v725 = vadd.f32 %v717, %v88
  %v726 = vadd.f32 %v722, %v89
  %v727 = vld [vmem:[%s11] sm:$0x1]
  %v728 = vld [vmem:[%s12] sm:$0x1]
  %v729 = vsel %vm109, %v725, 0.0
  %730 = vadd.xlane.f32.xlu0 %v729
  %v731 = vpop.xlane.xlu0 %730
  %v732 = vsel %vm109, %v726, 0.0
  %733 = vadd.xlane.f32.xlu0 %v732
  %v734 = vpop.xlane.xlu0 %733
  %v735 = vrcp.pop 32.0
  %v736 = vmul.f32 %v731, %v735
  %v737 = vmul.f32 %v734, %v735
  %v738 = vsub.f32 %v725, %v736
  %v739 = vsub.f32 %v726, %v737
  %v740 = vmul.f32 %v738, %v738
  %v741 = vmul.f32 %v739, %v739
  %v742 = vsel %vm109, %v740, 0.0
  %743 = vadd.xlane.f32.xlu0 %v742
  %v744 = vpop.xlane.xlu0 %743
  %v745 = vsel %vm109, %v741, 0.0
  %746 = vadd.xlane.f32.xlu0 %v745
  %v747 = vpop.xlane.xlu0 %746
  %v748 = vmul.f32 %v744, %v735
  %v749 = vmul.f32 %v747, %v735
  %v750 = vadd.f32 %v748, 1e-06
  %v751 = vadd.f32 %v749, 1e-06
  %v752 = vrsqrt.pop %v750
  %v753 = vrsqrt.pop %v751
  %v754 = vmul.f32 %v738, %v752
  %v755 = vmul.f32 %v739, %v753
  %v757 = vlaneseq
  %v758 = vshrl.u32 %v757, 7
  %v759 = vsub.s32 0, %v758
  %v760 = vrot.slane %v727, %v759
  %v762 = vmul.f32 %v754, %v760
  %v763 = vmul.f32 %v755, %v760
  %v765 = vlaneseq
  %v766 = vshrl.u32 %v765, 7
  %v767 = vsub.s32 0, %v766
  %v768 = vrot.slane %v728, %v767
  %v770 = vadd.f32 %v762, %v768
  %v771 = vadd.f32 %v763, %v768
  %v772 = vld [vmem:[%s13] sm:$0xff]
  %v773 = vld [vmem:[%s13 + $0x8] sm:$0xff]
  %v774 = vld [vmem:[%s13 + $0x10] sm:$0xff]
  %v775 = vld [vmem:[%s13 + $0x18] sm:$0xff]
  %v776 = vld [vmem:[%s14] sm:$0x1]
  %v778 = vlaneseq
  %v779 = vshrl.u32 %v778, 7
  %v780 = vsub.s32 0, %v779
  %v781 = vrot.slane %v776, %v780
  %v784 = vsel %vm109, %v770, 0
  %v787 = vsel %vm109, %v771, 0
  %789 = vmatprep.subr.mxu0 0.0
  %790 = vmatpush1.msra.mxu0 %v772
  %791 = vmatprep.subr.mxu0 0.0
  %792 = vmatpush1.msra.mxu0 %v773
  %793 = vmatprep.subr.mxu0 0.0
  %794 = vmatpush1.msra.mxu0 %v774
  %795 = vmatprep.subr.mxu0 0.0
  %796 = vmatpush1.msra.mxu0 %v775
  %797 = vmatprep.subr.mxu0 0.0
  %798 = vmatpush1.msra.mxu0 0.0
  %799 = vmatprep.subr.mxu0 0.0
  %800 = vmatpush1.msra.mxu0 0.0
  %801 = vmatprep.subr.mxu0 0.0
  %802 = vmatpush1.msra.mxu0 0.0
  %803 = vmatprep.subr.mxu0 0.0
  %804 = vmatpush1.msra.mxu0 0.0
  %805 = vmatprep.subr.mxu0 0.0
  %806 = vmatpush1.msra.mxu0 0.0
  %807 = vmatprep.subr.mxu0 0.0
  %808 = vmatpush1.msra.mxu0 0.0
  %809 = vmatprep.subr.mxu0 0.0
  %810 = vmatpush1.msra.mxu0 0.0
  %811 = vmatprep.subr.mxu0 0.0
  %812 = vmatpush1.msra.mxu0 0.0
  %813 = vmatprep.subr.mxu0 0.0
  %814 = vmatpush1.msra.mxu0 0.0
  %815 = vmatprep.subr.mxu0 0.0
  %816 = vmatpush1.msra.mxu0 0.0
  %817 = vmatprep.subr.mxu0 0.0
  %818 = vmatpush1.msra.mxu0 0.0
  %819 = vmatprep.subr.mxu0 0.0
  %820 = vmatpush1.msra.mxu0 0.0
  %821 = vmatprep.subr.mxu0 0.0
  %822 = vmatpush1.msra.mxu0 0.0
  %823 = vmatprep.subr.mxu0 0.0
  %824 = vmatpush1.msra.mxu0 0.0
  %825 = vmatprep.subr.mxu0 0.0
  %826 = vmatpush1.msra.mxu0 0.0
  %827 = vmatprep.subr.mxu0 0.0
  %828 = vmatpush1.msra.mxu0 0.0
  %829 = vmatprep.subr.mxu0 0.0
  %830 = vmatpush1.msra.mxu0 0.0
  %831 = vmatprep.subr.mxu0 0.0
  %832 = vmatpush1.msra.mxu0 0.0
  %833 = vmatprep.subr.mxu0 0.0
  %834 = vmatpush1.msra.mxu0 0.0
  %835 = vmatprep.subr.mxu0 0.0
  %836 = vmatpush1.msra.mxu0 0.0
  %837 = vmatprep.subr.mxu0 0.0
  %838 = vmatpush1.msra.mxu0 0.0
  %839 = vmatprep.subr.mxu0 0.0
  %840 = vmatpush1.msra.mxu0 0.0
  %841 = vmatprep.subr.mxu0 0.0
  %842 = vmatpush1.msra.mxu0 0.0
  %843 = vmatprep.subr.mxu0 0.0
  %844 = vmatpush1.msra.mxu0 0.0
  %845 = vmatprep.subr.mxu0 0.0
  %846 = vmatpush1.msra.mxu0 0.0
  %847 = vmatprep.subr.mxu0 0.0
  %848 = vmatpush1.msra.mxu0 0.0
  %849 = vmatprep.subr.mxu0 0.0
  %850 = vmatpush1.msra.mxu0 0.0
  %851 = vmatprep.subr.mxu0 0.0
  %852 = vmatpush1.msra.mxu0 0.0
  %853 = vmatprep.mubr.f32.mxu0 0.0
  %854 = vmatmul.mubr.f32.gmra.mrb[0].mxu0 %v784
  %v855 = vpop.f32.mrb[0].mxu0
  %v856 = vadd.f32 %v781, %v855
  %v857 = vpop.f32.mrb[0].mxu0
  %858 = vmatprep.mubr.f32.mxu0 0.0
  %859 = vmatmul.mubr.f32.gmra.mrb[0].mxu0 %v787
  %v860 = vpop.f32.mrb[0].mxu0
  %v861 = vadd.f32 %v781, %v860
  %v862 = vpop.f32.mrb[0].mxu0
  %863 = vdwg.mxu0
  %v864 = vmul.f32 %v856, 0.5
  %v865 = vmul.f32 %v861, 0.5
  %v866 = vmul.f32 %v856, 0.044715
  %v867 = vmul.f32 %v861, 0.044715
  %v868 = vmul.f32 %v866, %v856
  %v869 = vmul.f32 %v867, %v861
  %v870 = vmul.f32 %v868, %v856
  %v871 = vmul.f32 %v869, %v861
  %v872 = vadd.f32 %v856, %v870
  %v873 = vadd.f32 %v861, %v871
  %v874 = vmul.f32 %v872, 0.7978846
  %v875 = vmul.f32 %v873, 0.7978846
  %v876 = vtanh.pop %v874
  %v877 = vtanh.pop %v875
  %v878 = vadd.f32 %v876, 1.0
  %v879 = vadd.f32 %v877, 1.0
  %v880 = vmul.f32 %v864, %v878
  %v881 = vmul.f32 %v865, %v879
  %v882 = vld [vmem:[%s15] sm:$0xff]
  %v883 = vld [vmem:[%s15 + $0x8] sm:$0xff]
  %v884 = vld [vmem:[%s15 + $0x10] sm:$0xff]
  %v885 = vld [vmem:[%s15 + $0x18] sm:$0xff]
  %v886 = vld [vmem:[%s15 + $0x20] sm:$0xff]
  %v887 = vld [vmem:[%s15 + $0x28] sm:$0xff]
  %v888 = vld [vmem:[%s15 + $0x30] sm:$0xff]
  %v889 = vld [vmem:[%s15 + $0x38] sm:$0xff]
  %v890 = vld [vmem:[%s16] sm:$0x1]
  %v892 = vlaneseq
  %v893 = vshrl.u32 %v892, 7
  %v894 = vsub.s32 0, %v893
  %v895 = vrot.slane %v890, %v894
  %v898 = vsel %vm359, %v880, 0
  %v901 = vsel %vm359, %v881, 0
  %903 = vmatprep.subr.mxu0 0.0
  %904 = vmatpush1.msra.mxu0 %v882
  %905 = vmatprep.subr.mxu0 0.0
  %906 = vmatpush1.msra.mxu0 %v883
  %907 = vmatprep.subr.mxu0 0.0
  %908 = vmatpush1.msra.mxu0 %v884
  %909 = vmatprep.subr.mxu0 0.0
  %910 = vmatpush1.msra.mxu0 %v885
  %911 = vmatprep.subr.mxu0 0.0
  %912 = vmatpush1.msra.mxu0 %v886
  %913 = vmatprep.subr.mxu0 0.0
  %914 = vmatpush1.msra.mxu0 %v887
  %915 = vmatprep.subr.mxu0 0.0
  %916 = vmatpush1.msra.mxu0 %v888
  %917 = vmatprep.subr.mxu0 0.0
  %918 = vmatpush1.msra.mxu0 %v889
  %919 = vmatprep.subr.mxu0 0.0
  %920 = vmatpush1.msra.mxu0 0.0
  %921 = vmatprep.subr.mxu0 0.0
  %922 = vmatpush1.msra.mxu0 0.0
  %923 = vmatprep.subr.mxu0 0.0
  %924 = vmatpush1.msra.mxu0 0.0
  %925 = vmatprep.subr.mxu0 0.0
  %926 = vmatpush1.msra.mxu0 0.0
  %927 = vmatprep.subr.mxu0 0.0
  %928 = vmatpush1.msra.mxu0 0.0
  %929 = vmatprep.subr.mxu0 0.0
  %930 = vmatpush1.msra.mxu0 0.0
  %931 = vmatprep.subr.mxu0 0.0
  %932 = vmatpush1.msra.mxu0 0.0
  %933 = vmatprep.subr.mxu0 0.0
  %934 = vmatpush1.msra.mxu0 0.0
  %935 = vmatprep.subr.mxu0 0.0
  %936 = vmatpush1.msra.mxu0 0.0
  %937 = vmatprep.subr.mxu0 0.0
  %938 = vmatpush1.msra.mxu0 0.0
  %939 = vmatprep.subr.mxu0 0.0
  %940 = vmatpush1.msra.mxu0 0.0
  %941 = vmatprep.subr.mxu0 0.0
  %942 = vmatpush1.msra.mxu0 0.0
  %943 = vmatprep.subr.mxu0 0.0
  %944 = vmatpush1.msra.mxu0 0.0
  %945 = vmatprep.subr.mxu0 0.0
  %946 = vmatpush1.msra.mxu0 0.0
  %947 = vmatprep.subr.mxu0 0.0
  %948 = vmatpush1.msra.mxu0 0.0
  %949 = vmatprep.subr.mxu0 0.0
  %950 = vmatpush1.msra.mxu0 0.0
  %951 = vmatprep.subr.mxu0 0.0
  %952 = vmatpush1.msra.mxu0 0.0
  %953 = vmatprep.subr.mxu0 0.0
  %954 = vmatpush1.msra.mxu0 0.0
  %955 = vmatprep.subr.mxu0 0.0
  %956 = vmatpush1.msra.mxu0 0.0
  %957 = vmatprep.subr.mxu0 0.0
  %958 = vmatpush1.msra.mxu0 0.0
  %959 = vmatprep.subr.mxu0 0.0
  %960 = vmatpush1.msra.mxu0 0.0
  %961 = vmatprep.subr.mxu0 0.0
  %962 = vmatpush1.msra.mxu0 0.0
  %963 = vmatprep.subr.mxu0 0.0
  %964 = vmatpush1.msra.mxu0 0.0
  %965 = vmatprep.subr.mxu0 0.0
  %966 = vmatpush1.msra.mxu0 0.0
  %967 = vmatprep.mubr.f32.mxu0 0.0
  %968 = vmatmul.mubr.f32.gmra.mrb[0].mxu0 %v898
  %v969 = vpop.f32.mrb[0].mxu0
  %v970 = vadd.f32 %v895, %v969
  %v971 = vpop.f32.mrb[0].mxu0
  %972 = vmatprep.mubr.f32.mxu0 0.0
  %973 = vmatmul.mubr.f32.gmra.mrb[0].mxu0 %v901
  %v974 = vpop.f32.mrb[0].mxu0
  %v975 = vadd.f32 %v895, %v974
  %v976 = vpop.f32.mrb[0].mxu0
  %977 = vdwg.mxu0
  %v978 = vadd.f32 %v970, %v725
  %v979 = vadd.f32 %v975, %v726
  %s980 = scalar_lea.vmem %s5, 1
  %v981 = vld [vmem:[%s980] sm:$0x1]
  %s982 = scalar_lea.vmem %s6, 1
  %v983 = vld [vmem:[%s982] sm:$0x1]
  %v984 = vsel %vm109, %v978, 0.0
  %985 = vadd.xlane.f32.xlu0 %v984
  %v986 = vpop.xlane.xlu0 %985
  %v987 = vsel %vm109, %v979, 0.0
  %988 = vadd.xlane.f32.xlu0 %v987
  %v989 = vpop.xlane.xlu0 %988
  %v990 = vmul.f32 %v986, %v735
  %v991 = vmul.f32 %v989, %v735
  %v992 = vsub.f32 %v978, %v990
  %v993 = vsub.f32 %v979, %v991
  %v994 = vmul.f32 %v992, %v992
  %v995 = vmul.f32 %v993, %v993
  %v996 = vsel %vm109, %v994, 0.0
  %997 = vadd.xlane.f32.xlu0 %v996
  %v998 = vpop.xlane.xlu0 %997
  %v999 = vsel %vm109, %v995, 0.0
  %1000 = vadd.xlane.f32.xlu0 %v999
  %v1001 = vpop.xlane.xlu0 %1000
  %v1002 = vmul.f32 %v998, %v735
  %v1003 = vmul.f32 %v1001, %v735
  %v1004 = vadd.f32 %v1002, 1e-06
  %v1005 = vadd.f32 %v1003, 1e-06
  %v1006 = vrsqrt.pop %v1004
  %v1007 = vrsqrt.pop %v1005
  %v1008 = vmul.f32 %v992, %v1006
  %v1009 = vmul.f32 %v993, %v1007
  %v1011 = vlaneseq
  %v1012 = vshrl.u32 %v1011, 7
  %v1013 = vsub.s32 0, %v1012
  %v1014 = vrot.slane %v981, %v1013
  %v1016 = vmul.f32 %v1008, %v1014
  %v1017 = vmul.f32 %v1009, %v1014
  %v1019 = vlaneseq
  %v1020 = vshrl.u32 %v1019, 7
  %v1021 = vsub.s32 0, %v1020
  %v1022 = vrot.slane %v983, %v1021
  %v1024 = vadd.f32 %v1016, %v1022
  %v1025 = vadd.f32 %v1017, %v1022
  %s1026 = scalar_lea.vmem %s7, 32
  %v1027 = vld [vmem:[%s1026] sm:$0xff]
  %v1028 = vld [vmem:[%s1026 + $0x8] sm:$0xff]
  %v1029 = vld [vmem:[%s1026 + $0x10] sm:$0xff]
  %v1030 = vld [vmem:[%s1026 + $0x18] sm:$0xff]
  %s1031 = scalar_lea.vmem %s8, 1
  %v1032 = vld [vmem:[%s1031] sm:$0x1]
  %v1034 = vlaneseq
  %v1035 = vshrl.u32 %v1034, 7
  %v1036 = vsub.s32 0, %v1035
  %v1037 = vrot.slane %v1032, %v1036
  %v1040 = vsel %vm109, %v1024, 0
  %v1043 = vsel %vm109, %v1025, 0
  %1045 = vmatprep.subr.mxu0 0.0
  %1046 = vmatpush1.msra.mxu0 %v1027
  %1047 = vmatprep.subr.mxu0 0.0
  %1048 = vmatpush1.msra.mxu0 %v1028
  %1049 = vmatprep.subr.mxu0 0.0
  %1050 = vmatpush1.msra.mxu0 %v1029
  %1051 = vmatprep.subr.mxu0 0.0
  %1052 = vmatpush1.msra.mxu0 %v1030
  %1053 = vmatprep.subr.mxu0 0.0
  %1054 = vmatpush1.msra.mxu0 0.0
  %1055 = vmatprep.subr.mxu0 0.0
  %1056 = vmatpush1.msra.mxu0 0.0
  %1057 = vmatprep.subr.mxu0 0.0
  %1058 = vmatpush1.msra.mxu0 0.0
  %1059 = vmatprep.subr.mxu0 0.0
  %1060 = vmatpush1.msra.mxu0 0.0
  %1061 = vmatprep.subr.mxu0 0.0
  %1062 = vmatpush1.msra.mxu0 0.0
  %1063 = vmatprep.subr.mxu0 0.0
  %1064 = vmatpush1.msra.mxu0 0.0
  %1065 = vmatprep.subr.mxu0 0.0
  %1066 = vmatpush1.msra.mxu0 0.0
  %1067 = vmatprep.subr.mxu0 0.0
  %1068 = vmatpush1.msra.mxu0 0.0
  %1069 = vmatprep.subr.mxu0 0.0
  %1070 = vmatpush1.msra.mxu0 0.0
  %1071 = vmatprep.subr.mxu0 0.0
  %1072 = vmatpush1.msra.mxu0 0.0
  %1073 = vmatprep.subr.mxu0 0.0
  %1074 = vmatpush1.msra.mxu0 0.0
  %1075 = vmatprep.subr.mxu0 0.0
  %1076 = vmatpush1.msra.mxu0 0.0
  %1077 = vmatprep.subr.mxu0 0.0
  %1078 = vmatpush1.msra.mxu0 0.0
  %1079 = vmatprep.subr.mxu0 0.0
  %1080 = vmatpush1.msra.mxu0 0.0
  %1081 = vmatprep.subr.mxu0 0.0
  %1082 = vmatpush1.msra.mxu0 0.0
  %1083 = vmatprep.subr.mxu0 0.0
  %1084 = vmatpush1.msra.mxu0 0.0
  %1085 = vmatprep.subr.mxu0 0.0
  %1086 = vmatpush1.msra.mxu0 0.0
  %1087 = vmatprep.subr.mxu0 0.0
  %1088 = vmatpush1.msra.mxu0 0.0
  %1089 = vmatprep.subr.mxu0 0.0
  %1090 = vmatpush1.msra.mxu0 0.0
  %1091 = vmatprep.subr.mxu0 0.0
  %1092 = vmatpush1.msra.mxu0 0.0
  %1093 = vmatprep.subr.mxu0 0.0
  %1094 = vmatpush1.msra.mxu0 0.0
  %1095 = vmatprep.subr.mxu0 0.0
  %1096 = vmatpush1.msra.mxu0 0.0
  %1097 = vmatprep.subr.mxu0 0.0
  %1098 = vmatpush1.msra.mxu0 0.0
  %1099 = vmatprep.subr.mxu0 0.0
  %1100 = vmatpush1.msra.mxu0 0.0
  %1101 = vmatprep.subr.mxu0 0.0
  %1102 = vmatpush1.msra.mxu0 0.0
  %1103 = vmatprep.subr.mxu0 0.0
  %1104 = vmatpush1.msra.mxu0 0.0
  %1105 = vmatprep.subr.mxu0 0.0
  %1106 = vmatpush1.msra.mxu0 0.0
  %1107 = vmatprep.subr.mxu0 0.0
  %1108 = vmatpush1.msra.mxu0 0.0
  %1109 = vmatprep.mubr.f32.mxu0 0.0
  %1110 = vmatmul.mubr.f32.gmra.mrb[0].mxu0 %v1040
  %v1111 = vpop.f32.mrb[0].mxu0
  %v1112 = vadd.f32 %v1037, %v1111
  %v1113 = vpop.f32.mrb[0].mxu0
  %1114 = vmatprep.mubr.f32.mxu0 0.0
  %1115 = vmatmul.mubr.f32.gmra.mrb[0].mxu0 %v1043
  %v1116 = vpop.f32.mrb[0].mxu0
  %v1117 = vadd.f32 %v1037, %v1116
  %v1118 = vpop.f32.mrb[0].mxu0
  %1119 = vdwg.mxu0
  %1121 = vrot.lane.b32.xlu0 %v1112, 120
  %v1122 = vpop.permute.xlu0 %1121
  %1123 = vrot.lane.b32.xlu0 %v1112, 112
  %v1124 = vpop.permute.xlu0 %1123
  %1125 = vrot.lane.b32.xlu0 %v1112, 104
  %v1126 = vpop.permute.xlu0 %1125
  %1128 = vrot.lane.b32.xlu0 %v1117, 120
  %v1129 = vpop.permute.xlu0 %1128
  %1130 = vrot.lane.b32.xlu0 %v1117, 112
  %v1131 = vpop.permute.xlu0 %1130
  %1132 = vrot.lane.b32.xlu0 %v1117, 104
  %v1133 = vpop.permute.xlu0 %1132
  %1134 = vrot.lane.b32.xlu0 %v1112, 96
  %v1135 = vpop.permute.xlu0 %1134
  %1136 = vrot.lane.b32.xlu0 %v1122, 96
  %v1137 = vpop.permute.xlu0 %1136
  %1138 = vrot.lane.b32.xlu0 %v1124, 96
  %v1139 = vpop.permute.xlu0 %1138
  %1140 = vrot.lane.b32.xlu0 %v1126, 96
  %v1141 = vpop.permute.xlu0 %1140
  %1142 = vrot.lane.b32.xlu0 %v1117, 96
  %v1143 = vpop.permute.xlu0 %1142
  %1144 = vrot.lane.b32.xlu0 %v1129, 96
  %v1145 = vpop.permute.xlu0 %1144
  %1146 = vrot.lane.b32.xlu0 %v1131, 96
  %v1147 = vpop.permute.xlu0 %1146
  %1148 = vrot.lane.b32.xlu0 %v1133, 96
  %v1149 = vpop.permute.xlu0 %1148
  %v1150 = vsel %vm221, %v1112, 0
  %v1152 = vsel %vm221, %v1122, 0
  %v1154 = vsel %vm221, %v1124, 0
  %v1156 = vsel %vm221, %v1126, 0
  %v1158 = vsel %vm221, %v1117, 0
  %v1160 = vsel %vm221, %v1129, 0
  %v1162 = vsel %vm221, %v1131, 0
  %v1164 = vsel %vm221, %v1133, 0
  %v1166 = vsel %vm221, %v1135, 0
  %v1168 = vsel %vm221, %v1137, 0
  %v1170 = vsel %vm221, %v1139, 0
  %v1172 = vsel %vm221, %v1141, 0
  %v1174 = vsel %vm221, %v1143, 0
  %v1176 = vsel %vm221, %v1145, 0
  %v1178 = vsel %vm221, %v1147, 0
  %v1180 = vsel %vm221, %v1149, 0
  %1182 = vmatprep.subr.mxu0 0.0
  %1183 = vmatpush1.xpose.msra.mxu0 %v1166
  %1184 = vmatprep.subr.mxu0 0.0
  %1185 = vmatpush1.xpose.msra.mxu0 %v1168
  %1186 = vmatprep.subr.mxu0 0.0
  %1187 = vmatpush1.xpose.msra.mxu0 %v1170
  %1188 = vmatprep.subr.mxu0 0.0
  %1189 = vmatpush1.xpose.msra.mxu0 %v1172
  %1190 = vmatprep.subr.mxu0 0.0
  %1191 = vmatpush1.xpose.msra.mxu0 %v1174
  %1192 = vmatprep.subr.mxu0 0.0
  %1193 = vmatpush1.xpose.msra.mxu0 %v1176
  %1194 = vmatprep.subr.mxu0 0.0
  %1195 = vmatpush1.xpose.msra.mxu0 %v1178
  %1196 = vmatprep.subr.mxu0 0.0
  %1197 = vmatpush1.xpose.msra.mxu0 %v1180
  %1198 = vmatprep.subr.mxu0 0.0
  %1199 = vmatpush1.xpose.msra.mxu0 0.0
  %1200 = vmatprep.subr.mxu0 0.0
  %1201 = vmatpush1.xpose.msra.mxu0 0.0
  %1202 = vmatprep.subr.mxu0 0.0
  %1203 = vmatpush1.xpose.msra.mxu0 0.0
  %1204 = vmatprep.subr.mxu0 0.0
  %1205 = vmatpush1.xpose.msra.mxu0 0.0
  %1206 = vmatprep.subr.mxu0 0.0
  %1207 = vmatpush1.xpose.msra.mxu0 0.0
  %1208 = vmatprep.subr.mxu0 0.0
  %1209 = vmatpush1.xpose.msra.mxu0 0.0
  %1210 = vmatprep.subr.mxu0 0.0
  %1211 = vmatpush1.xpose.msra.mxu0 0.0
  %1212 = vmatprep.subr.mxu0 0.0
  %1213 = vmatpush1.xpose.msra.mxu0 0.0
  %1214 = vmatprep.subr.mxu0 0.0
  %1215 = vmatpush1.xpose.msra.mxu0 0.0
  %1216 = vmatprep.subr.mxu0 0.0
  %1217 = vmatpush1.xpose.msra.mxu0 0.0
  %1218 = vmatprep.subr.mxu0 0.0
  %1219 = vmatpush1.xpose.msra.mxu0 0.0
  %1220 = vmatprep.subr.mxu0 0.0
  %1221 = vmatpush1.xpose.msra.mxu0 0.0
  %1222 = vmatprep.subr.mxu0 0.0
  %1223 = vmatpush1.xpose.msra.mxu0 0.0
  %1224 = vmatprep.subr.mxu0 0.0
  %1225 = vmatpush1.xpose.msra.mxu0 0.0
  %1226 = vmatprep.subr.mxu0 0.0
  %1227 = vmatpush1.xpose.msra.mxu0 0.0
  %1228 = vmatprep.subr.mxu0 0.0
  %1229 = vmatpush1.xpose.msra.mxu0 0.0
  %1230 = vmatprep.subr.mxu0 0.0
  %1231 = vmatpush1.xpose.msra.mxu0 0.0
  %1232 = vmatprep.subr.mxu0 0.0
  %1233 = vmatpush1.xpose.msra.mxu0 0.0
  %1234 = vmatprep.subr.mxu0 0.0
  %1235 = vmatpush1.xpose.msra.mxu0 0.0
  %1236 = vmatprep.subr.mxu0 0.0
  %1237 = vmatpush1.xpose.msra.mxu0 0.0
  %1238 = vmatprep.subr.mxu0 0.0
  %1239 = vmatpush1.xpose.msra.mxu0 0.0
  %1240 = vmatprep.subr.mxu0 0.0
  %1241 = vmatpush1.xpose.msra.mxu0 0.0
  %1242 = vmatprep.subr.mxu0 0.0
  %1243 = vmatpush1.xpose.msra.mxu0 0.0
  %1244 = vmatprep.subr.mxu0 0.0
  %1245 = vmatpush1.xpose.msra.mxu0 0.0
  %1246 = vmatprep.mubr.f32.mxu0 0.0
  %1247 = vmatmul.mubr.f32.gmra.mrb[0].mxu0 %v1150
  %v1248 = vpop.f32.mrb[0].mxu0
  %v1249 = vadd.f32 %v90, %v1248
  %v1250 = vpop.f32.mrb[0].mxu0
  %1251 = vmatprep.mubr.f32.mxu0 0.0
  %1252 = vmatmul.mubr.f32.gmra.mrb[0].mxu0 %v1152
  %v1253 = vpop.f32.mrb[0].mxu0
  %v1254 = vadd.f32 %v91, %v1253
  %v1255 = vpop.f32.mrb[0].mxu0
  %1256 = vmatprep.mubr.f32.mxu0 0.0
  %1257 = vmatmul.mubr.f32.gmra.mrb[0].mxu0 %v1154
  %v1258 = vpop.f32.mrb[0].mxu0
  %v1259 = vadd.f32 %v92, %v1258
  %v1260 = vpop.f32.mrb[0].mxu0
  %1261 = vmatprep.mubr.f32.mxu0 0.0
  %1262 = vmatmul.mubr.f32.gmra.mrb[0].mxu0 %v1156
  %v1263 = vpop.f32.mrb[0].mxu0
  %v1264 = vadd.f32 %v93, %v1263
  %v1265 = vpop.f32.mrb[0].mxu0
  %1266 = vmatprep.mubr.f32.mxu0 0.0
  %1267 = vmatmul.mubr.f32.gmra.mrb[0].mxu0 %v1158
  %v1268 = vpop.f32.mrb[0].mxu0
  %v1269 = vadd.f32 %v94, %v1268
  %v1270 = vpop.f32.mrb[0].mxu0
  %1271 = vmatprep.mubr.f32.mxu0 0.0
  %1272 = vmatmul.mubr.f32.gmra.mrb[0].mxu0 %v1160
  %v1273 = vpop.f32.mrb[0].mxu0
  %v1274 = vadd.f32 %v95, %v1273
  %v1275 = vpop.f32.mrb[0].mxu0
  %1276 = vmatprep.mubr.f32.mxu0 0.0
  %1277 = vmatmul.mubr.f32.gmra.mrb[0].mxu0 %v1162
  %v1278 = vpop.f32.mrb[0].mxu0
  %v1279 = vadd.f32 %v96, %v1278
  %v1280 = vpop.f32.mrb[0].mxu0
  %1281 = vmatprep.mubr.f32.mxu0 0.0
  %1282 = vmatmul.mubr.f32.gmra.mrb[0].mxu0 %v1164
  %v1283 = vpop.f32.mrb[0].mxu0
  %v1284 = vadd.f32 %v97, %v1283
  %v1285 = vpop.f32.mrb[0].mxu0
  %1286 = vdwg.mxu0
  %v1287 = vsel %vm359, %v1249, -inf
  %1288 = vmax.xlane.f32.xlu0 %v1287
  %v1289 = vpop.xlane.xlu0 %1288
  %v1290 = vsel %vm359, %v1254, -inf
  %1291 = vmax.xlane.f32.xlu0 %v1290
  %v1292 = vpop.xlane.xlu0 %1291
  %v1293 = vsel %vm359, %v1259, -inf
  %1294 = vmax.xlane.f32.xlu0 %v1293
  %v1295 = vpop.xlane.xlu0 %1294
  %v1296 = vsel %vm359, %v1264, -inf
  %1297 = vmax.xlane.f32.xlu0 %v1296
  %v1298 = vpop.xlane.xlu0 %1297
  %v1299 = vsel %vm359, %v1269, -inf
  %1300 = vmax.xlane.f32.xlu0 %v1299
  %v1301 = vpop.xlane.xlu0 %1300
  %v1302 = vsel %vm359, %v1274, -inf
  %1303 = vmax.xlane.f32.xlu0 %v1302
  %v1304 = vpop.xlane.xlu0 %1303
  %v1305 = vsel %vm359, %v1279, -inf
  %1306 = vmax.xlane.f32.xlu0 %v1305
  %v1307 = vpop.xlane.xlu0 %1306
  %v1308 = vsel %vm359, %v1284, -inf
  %1309 = vmax.xlane.f32.xlu0 %v1308
  %v1310 = vpop.xlane.xlu0 %1309
  %v1311 = vsub.f32 %v1249, %v1289
  %v1312 = vsub.f32 %v1254, %v1292
  %v1313 = vsub.f32 %v1259, %v1295
  %v1314 = vsub.f32 %v1264, %v1298
  %v1315 = vsub.f32 %v1269, %v1301
  %v1316 = vsub.f32 %v1274, %v1304
  %v1317 = vsub.f32 %v1279, %v1307
  %v1318 = vsub.f32 %v1284, %v1310
  %v1319 = vmul.f32 %v1311, 1.442695
  %v1320 = vpow.pop %v1319
  %v1321 = vmul.f32 %v1312, 1.442695
  %v1322 = vpow.pop %v1321
  %v1323 = vmul.f32 %v1313, 1.442695
  %v1324 = vpow.pop %v1323
  %v1325 = vmul.f32 %v1314, 1.442695
  %v1326 = vpow.pop %v1325
  %v1327 = vmul.f32 %v1315, 1.442695
  %v1328 = vpow.pop %v1327
  %v1329 = vmul.f32 %v1316, 1.442695
  %v1330 = vpow.pop %v1329
  %v1331 = vmul.f32 %v1317, 1.442695
  %v1332 = vpow.pop %v1331
  %v1333 = vmul.f32 %v1318, 1.442695
  %v1334 = vpow.pop %v1333
  %v1335 = vsel %vm359, %v1320, 0.0
  %1336 = vadd.xlane.f32.xlu0 %v1335
  %v1337 = vpop.xlane.xlu0 %1336
  %v1338 = vsel %vm359, %v1322, 0.0
  %1339 = vadd.xlane.f32.xlu0 %v1338
  %v1340 = vpop.xlane.xlu0 %1339
  %v1341 = vsel %vm359, %v1324, 0.0
  %1342 = vadd.xlane.f32.xlu0 %v1341
  %v1343 = vpop.xlane.xlu0 %1342
  %v1344 = vsel %vm359, %v1326, 0.0
  %1345 = vadd.xlane.f32.xlu0 %v1344
  %v1346 = vpop.xlane.xlu0 %1345
  %v1347 = vsel %vm359, %v1328, 0.0
  %1348 = vadd.xlane.f32.xlu0 %v1347
  %v1349 = vpop.xlane.xlu0 %1348
  %v1350 = vsel %vm359, %v1330, 0.0
  %1351 = vadd.xlane.f32.xlu0 %v1350
  %v1352 = vpop.xlane.xlu0 %1351
  %v1353 = vsel %vm359, %v1332, 0.0
  %1354 = vadd.xlane.f32.xlu0 %v1353
  %v1355 = vpop.xlane.xlu0 %1354
  %v1356 = vsel %vm359, %v1334, 0.0
  %1357 = vadd.xlane.f32.xlu0 %v1356
  %v1358 = vpop.xlane.xlu0 %1357
  %v1359 = vrcp.pop %v1337
  %v1360 = vrcp.pop %v1340
  %v1361 = vrcp.pop %v1343
  %v1362 = vrcp.pop %v1346
  %v1363 = vrcp.pop %v1349
  %v1364 = vrcp.pop %v1352
  %v1365 = vrcp.pop %v1355
  %v1366 = vrcp.pop %v1358
  %v1367 = vmul.f32 %v1320, %v1359
  %v1368 = vmul.f32 %v1322, %v1360
  %v1369 = vmul.f32 %v1324, %v1361
  %v1370 = vmul.f32 %v1326, %v1362
  %v1371 = vmul.f32 %v1328, %v1363
  %v1372 = vmul.f32 %v1330, %v1364
  %v1373 = vmul.f32 %v1332, %v1365
  %v1374 = vmul.f32 %v1334, %v1366
  %1375 = vrot.lane.b32.xlu0 %v1112, 64
  %v1376 = vpop.permute.xlu0 %1375
  %1377 = vrot.lane.b32.xlu0 %v1122, 64
  %v1378 = vpop.permute.xlu0 %1377
  %1379 = vrot.lane.b32.xlu0 %v1124, 64
  %v1380 = vpop.permute.xlu0 %1379
  %1381 = vrot.lane.b32.xlu0 %v1126, 64
  %v1382 = vpop.permute.xlu0 %1381
  %1383 = vrot.lane.b32.xlu0 %v1117, 64
  %v1384 = vpop.permute.xlu0 %1383
  %1385 = vrot.lane.b32.xlu0 %v1129, 64
  %v1386 = vpop.permute.xlu0 %1385
  %1387 = vrot.lane.b32.xlu0 %v1131, 64
  %v1388 = vpop.permute.xlu0 %1387
  %1389 = vrot.lane.b32.xlu0 %v1133, 64
  %v1390 = vpop.permute.xlu0 %1389
  %v1400 = vsel %vm359, %v1367, 0
  %v1403 = vsel %vm359, %v1368, 0
  %v1406 = vsel %vm359, %v1369, 0
  %v1409 = vsel %vm359, %v1370, 0
  %v1412 = vsel %vm359, %v1371, 0
  %v1415 = vsel %vm359, %v1372, 0
  %v1418 = vsel %vm359, %v1373, 0
  %v1421 = vsel %vm359, %v1374, 0
  %1423 = vmatprep.subr.mxu0 0.0
  %1424 = vmatpush1.msra.mxu0 %v1376
  %1425 = vmatprep.subr.mxu0 0.0
  %1426 = vmatpush1.msra.mxu0 %v1378
  %1427 = vmatprep.subr.mxu0 0.0
  %1428 = vmatpush1.msra.mxu0 %v1380
  %1429 = vmatprep.subr.mxu0 0.0
  %1430 = vmatpush1.msra.mxu0 %v1382
  %1431 = vmatprep.subr.mxu0 0.0
  %1432 = vmatpush1.msra.mxu0 %v1384
  %1433 = vmatprep.subr.mxu0 0.0
  %1434 = vmatpush1.msra.mxu0 %v1386
  %1435 = vmatprep.subr.mxu0 0.0
  %1436 = vmatpush1.msra.mxu0 %v1388
  %1437 = vmatprep.subr.mxu0 0.0
  %1438 = vmatpush1.msra.mxu0 %v1390
  %1439 = vmatprep.subr.mxu0 0.0
  %1440 = vmatpush1.msra.mxu0 0.0
  %1441 = vmatprep.subr.mxu0 0.0
  %1442 = vmatpush1.msra.mxu0 0.0
  %1443 = vmatprep.subr.mxu0 0.0
  %1444 = vmatpush1.msra.mxu0 0.0
  %1445 = vmatprep.subr.mxu0 0.0
  %1446 = vmatpush1.msra.mxu0 0.0
  %1447 = vmatprep.subr.mxu0 0.0
  %1448 = vmatpush1.msra.mxu0 0.0
  %1449 = vmatprep.subr.mxu0 0.0
  %1450 = vmatpush1.msra.mxu0 0.0
  %1451 = vmatprep.subr.mxu0 0.0
  %1452 = vmatpush1.msra.mxu0 0.0
  %1453 = vmatprep.subr.mxu0 0.0
  %1454 = vmatpush1.msra.mxu0 0.0
  %1455 = vmatprep.subr.mxu0 0.0
  %1456 = vmatpush1.msra.mxu0 0.0
  %1457 = vmatprep.subr.mxu0 0.0
  %1458 = vmatpush1.msra.mxu0 0.0
  %1459 = vmatprep.subr.mxu0 0.0
  %1460 = vmatpush1.msra.mxu0 0.0
  %1461 = vmatprep.subr.mxu0 0.0
  %1462 = vmatpush1.msra.mxu0 0.0
  %1463 = vmatprep.subr.mxu0 0.0
  %1464 = vmatpush1.msra.mxu0 0.0
  %1465 = vmatprep.subr.mxu0 0.0
  %1466 = vmatpush1.msra.mxu0 0.0
  %1467 = vmatprep.subr.mxu0 0.0
  %1468 = vmatpush1.msra.mxu0 0.0
  %1469 = vmatprep.subr.mxu0 0.0
  %1470 = vmatpush1.msra.mxu0 0.0
  %1471 = vmatprep.subr.mxu0 0.0
  %1472 = vmatpush1.msra.mxu0 0.0
  %1473 = vmatprep.subr.mxu0 0.0
  %1474 = vmatpush1.msra.mxu0 0.0
  %1475 = vmatprep.subr.mxu0 0.0
  %1476 = vmatpush1.msra.mxu0 0.0
  %1477 = vmatprep.subr.mxu0 0.0
  %1478 = vmatpush1.msra.mxu0 0.0
  %1479 = vmatprep.subr.mxu0 0.0
  %1480 = vmatpush1.msra.mxu0 0.0
  %1481 = vmatprep.subr.mxu0 0.0
  %1482 = vmatpush1.msra.mxu0 0.0
  %1483 = vmatprep.subr.mxu0 0.0
  %1484 = vmatpush1.msra.mxu0 0.0
  %1485 = vmatprep.subr.mxu0 0.0
  %1486 = vmatpush1.msra.mxu0 0.0
  %1487 = vmatprep.mubr.f32.mxu0 0.0
  %1488 = vmatmul.mubr.f32.gmra.mrb[0].mxu0 %v1400
  %v1489 = vpop.f32.mrb[0].mxu0
  %v1490 = vadd.f32 0.0, %v1489
  %v1491 = vpop.f32.mrb[0].mxu0
  %1492 = vmatprep.mubr.f32.mxu0 0.0
  %1493 = vmatmul.mubr.f32.gmra.mrb[0].mxu0 %v1403
  %v1494 = vpop.f32.mrb[0].mxu0
  %v1495 = vadd.f32 0.0, %v1494
  %v1496 = vpop.f32.mrb[0].mxu0
  %1497 = vmatprep.mubr.f32.mxu0 0.0
  %1498 = vmatmul.mubr.f32.gmra.mrb[0].mxu0 %v1406
  %v1499 = vpop.f32.mrb[0].mxu0
  %v1500 = vadd.f32 0.0, %v1499
  %v1501 = vpop.f32.mrb[0].mxu0
  %1502 = vmatprep.mubr.f32.mxu0 0.0
  %1503 = vmatmul.mubr.f32.gmra.mrb[0].mxu0 %v1409
  %v1504 = vpop.f32.mrb[0].mxu0
  %v1505 = vadd.f32 0.0, %v1504
  %v1506 = vpop.f32.mrb[0].mxu0
  %1507 = vmatprep.mubr.f32.mxu0 0.0
  %1508 = vmatmul.mubr.f32.gmra.mrb[0].mxu0 %v1412
  %v1509 = vpop.f32.mrb[0].mxu0
  %v1510 = vadd.f32 0.0, %v1509
  %v1511 = vpop.f32.mrb[0].mxu0
  %1512 = vmatprep.mubr.f32.mxu0 0.0
  %1513 = vmatmul.mubr.f32.gmra.mrb[0].mxu0 %v1415
  %v1514 = vpop.f32.mrb[0].mxu0
  %v1515 = vadd.f32 0.0, %v1514
  %v1516 = vpop.f32.mrb[0].mxu0
  %1517 = vmatprep.mubr.f32.mxu0 0.0
  %1518 = vmatmul.mubr.f32.gmra.mrb[0].mxu0 %v1418
  %v1519 = vpop.f32.mrb[0].mxu0
  %v1520 = vadd.f32 0.0, %v1519
  %v1521 = vpop.f32.mrb[0].mxu0
  %1522 = vmatprep.mubr.f32.mxu0 0.0
  %1523 = vmatmul.mubr.f32.gmra.mrb[0].mxu0 %v1421
  %v1524 = vpop.f32.mrb[0].mxu0
  %v1525 = vadd.f32 0.0, %v1524
  %v1526 = vpop.f32.mrb[0].mxu0
  %1527 = vdwg.mxu0
  %1529 = vrot.lane.b32.xlu0 %v1495, 8
  %v1530 = vpop.permute.xlu0 %1529
  %1533 = vrot.lane.b32.xlu0 %v1500, 16
  %v1534 = vpop.permute.xlu0 %1533
  %1537 = vrot.lane.b32.xlu0 %v1505, 24
  %v1538 = vpop.permute.xlu0 %1537
  %v1540 = vsel %vm221, %v1490, %v1530
  %v1541 = vsel %vm614, %v1540, %v1534
  %v1542 = vsel %vm616, %v1541, %v1538
  %1544 = vrot.lane.b32.xlu0 %v1515, 8
  %v1545 = vpop.permute.xlu0 %1544
  %1548 = vrot.lane.b32.xlu0 %v1520, 16
  %v1549 = vpop.permute.xlu0 %1548
  %1552 = vrot.lane.b32.xlu0 %v1525, 24
  %v1553 = vpop.permute.xlu0 %1552
  %v1555 = vsel %vm221, %v1510, %v1545
  %v1556 = vsel %vm614, %v1555, %v1549
  %v1557 = vsel %vm616, %v1556, %v1553
  %s1558 = scalar_lea.vmem %s9, 32
  %v1559 = vld [vmem:[%s1558] sm:$0xff]
  %v1560 = vld [vmem:[%s1558 + $0x8] sm:$0xff]
  %v1561 = vld [vmem:[%s1558 + $0x10] sm:$0xff]
  %v1562 = vld [vmem:[%s1558 + $0x18] sm:$0xff]
  %s1563 = scalar_lea.vmem %s10, 1
  %v1564 = vld [vmem:[%s1563] sm:$0x1]
  %v1566 = vlaneseq
  %v1567 = vshrl.u32 %v1566, 7
  %v1568 = vsub.s32 0, %v1567
  %v1569 = vrot.slane %v1564, %v1568
  %v1572 = vsel %vm109, %v1542, 0
  %v1575 = vsel %vm109, %v1557, 0
  %1577 = vmatprep.subr.mxu0 0.0
  %1578 = vmatpush1.msra.mxu0 %v1559
  %1579 = vmatprep.subr.mxu0 0.0
  %1580 = vmatpush1.msra.mxu0 %v1560
  %1581 = vmatprep.subr.mxu0 0.0
  %1582 = vmatpush1.msra.mxu0 %v1561
  %1583 = vmatprep.subr.mxu0 0.0
  %1584 = vmatpush1.msra.mxu0 %v1562
  %1585 = vmatprep.subr.mxu0 0.0
  %1586 = vmatpush1.msra.mxu0 0.0
  %1587 = vmatprep.subr.mxu0 0.0
  %1588 = vmatpush1.msra.mxu0 0.0
  %1589 = vmatprep.subr.mxu0 0.0
  %1590 = vmatpush1.msra.mxu0 0.0
  %1591 = vmatprep.subr.mxu0 0.0
  %1592 = vmatpush1.msra.mxu0 0.0
  %1593 = vmatprep.subr.mxu0 0.0
  %1594 = vmatpush1.msra.mxu0 0.0
  %1595 = vmatprep.subr.mxu0 0.0
  %1596 = vmatpush1.msra.mxu0 0.0
  %1597 = vmatprep.subr.mxu0 0.0
  %1598 = vmatpush1.msra.mxu0 0.0
  %1599 = vmatprep.subr.mxu0 0.0
  %1600 = vmatpush1.msra.mxu0 0.0
  %1601 = vmatprep.subr.mxu0 0.0
  %1602 = vmatpush1.msra.mxu0 0.0
  %1603 = vmatprep.subr.mxu0 0.0
  %1604 = vmatpush1.msra.mxu0 0.0
  %1605 = vmatprep.subr.mxu0 0.0
  %1606 = vmatpush1.msra.mxu0 0.0
  %1607 = vmatprep.subr.mxu0 0.0
  %1608 = vmatpush1.msra.mxu0 0.0
  %1609 = vmatprep.subr.mxu0 0.0
  %1610 = vmatpush1.msra.mxu0 0.0
  %1611 = vmatprep.subr.mxu0 0.0
  %1612 = vmatpush1.msra.mxu0 0.0
  %1613 = vmatprep.subr.mxu0 0.0
  %1614 = vmatpush1.msra.mxu0 0.0
  %1615 = vmatprep.subr.mxu0 0.0
  %1616 = vmatpush1.msra.mxu0 0.0
  %1617 = vmatprep.subr.mxu0 0.0
  %1618 = vmatpush1.msra.mxu0 0.0
  %1619 = vmatprep.subr.mxu0 0.0
  %1620 = vmatpush1.msra.mxu0 0.0
  %1621 = vmatprep.subr.mxu0 0.0
  %1622 = vmatpush1.msra.mxu0 0.0
  %1623 = vmatprep.subr.mxu0 0.0
  %1624 = vmatpush1.msra.mxu0 0.0
  %1625 = vmatprep.subr.mxu0 0.0
  %1626 = vmatpush1.msra.mxu0 0.0
  %1627 = vmatprep.subr.mxu0 0.0
  %1628 = vmatpush1.msra.mxu0 0.0
  %1629 = vmatprep.subr.mxu0 0.0
  %1630 = vmatpush1.msra.mxu0 0.0
  %1631 = vmatprep.subr.mxu0 0.0
  %1632 = vmatpush1.msra.mxu0 0.0
  %1633 = vmatprep.subr.mxu0 0.0
  %1634 = vmatpush1.msra.mxu0 0.0
  %1635 = vmatprep.subr.mxu0 0.0
  %1636 = vmatpush1.msra.mxu0 0.0
  %1637 = vmatprep.subr.mxu0 0.0
  %1638 = vmatpush1.msra.mxu0 0.0
  %1639 = vmatprep.subr.mxu0 0.0
  %1640 = vmatpush1.msra.mxu0 0.0
  %1641 = vmatprep.mubr.f32.mxu0 0.0
  %1642 = vmatmul.mubr.f32.gmra.mrb[0].mxu0 %v1572
  %v1643 = vpop.f32.mrb[0].mxu0
  %v1644 = vadd.f32 %v1569, %v1643
  %v1645 = vpop.f32.mrb[0].mxu0
  %1646 = vmatprep.mubr.f32.mxu0 0.0
  %1647 = vmatmul.mubr.f32.gmra.mrb[0].mxu0 %v1575
  %v1648 = vpop.f32.mrb[0].mxu0
  %v1649 = vadd.f32 %v1569, %v1648
  %v1650 = vpop.f32.mrb[0].mxu0
  %1651 = vdwg.mxu0
  %v1652 = vadd.f32 %v1644, %v978
  %v1653 = vadd.f32 %v1649, %v979
  %s1654 = scalar_lea.vmem %s11, 1
  %v1655 = vld [vmem:[%s1654] sm:$0x1]
  %s1656 = scalar_lea.vmem %s12, 1
  %v1657 = vld [vmem:[%s1656] sm:$0x1]
  %v1658 = vsel %vm109, %v1652, 0.0
  %1659 = vadd.xlane.f32.xlu0 %v1658
  %v1660 = vpop.xlane.xlu0 %1659
  %v1661 = vsel %vm109, %v1653, 0.0
  %1662 = vadd.xlane.f32.xlu0 %v1661
  %v1663 = vpop.xlane.xlu0 %1662
  %v1664 = vmul.f32 %v1660, %v735
  %v1665 = vmul.f32 %v1663, %v735
  %v1666 = vsub.f32 %v1652, %v1664
  %v1667 = vsub.f32 %v1653, %v1665
  %v1668 = vmul.f32 %v1666, %v1666
  %v1669 = vmul.f32 %v1667, %v1667
  %v1670 = vsel %vm109, %v1668, 0.0
  %1671 = vadd.xlane.f32.xlu0 %v1670
  %v1672 = vpop.xlane.xlu0 %1671
  %v1673 = vsel %vm109, %v1669, 0.0
  %1674 = vadd.xlane.f32.xlu0 %v1673
  %v1675 = vpop.xlane.xlu0 %1674
  %v1676 = vmul.f32 %v1672, %v735
  %v1677 = vmul.f32 %v1675, %v735
  %v1678 = vadd.f32 %v1676, 1e-06
  %v1679 = vadd.f32 %v1677, 1e-06
  %v1680 = vrsqrt.pop %v1678
  %v1681 = vrsqrt.pop %v1679
  %v1682 = vmul.f32 %v1666, %v1680
  %v1683 = vmul.f32 %v1667, %v1681
  %v1685 = vlaneseq
  %v1686 = vshrl.u32 %v1685, 7
  %v1687 = vsub.s32 0, %v1686
  %v1688 = vrot.slane %v1655, %v1687
  %v1690 = vmul.f32 %v1682, %v1688
  %v1691 = vmul.f32 %v1683, %v1688
  %v1693 = vlaneseq
  %v1694 = vshrl.u32 %v1693, 7
  %v1695 = vsub.s32 0, %v1694
  %v1696 = vrot.slane %v1657, %v1695
  %v1698 = vadd.f32 %v1690, %v1696
  %v1699 = vadd.f32 %v1691, %v1696
  %s1700 = scalar_lea.vmem %s13, 32
  %v1701 = vld [vmem:[%s1700] sm:$0xff]
  %v1702 = vld [vmem:[%s1700 + $0x8] sm:$0xff]
  %v1703 = vld [vmem:[%s1700 + $0x10] sm:$0xff]
  %v1704 = vld [vmem:[%s1700 + $0x18] sm:$0xff]
  %s1705 = scalar_lea.vmem %s14, 1
  %v1706 = vld [vmem:[%s1705] sm:$0x1]
  %v1708 = vlaneseq
  %v1709 = vshrl.u32 %v1708, 7
  %v1710 = vsub.s32 0, %v1709
  %v1711 = vrot.slane %v1706, %v1710
  %v1714 = vsel %vm109, %v1698, 0
  %v1717 = vsel %vm109, %v1699, 0
  %1719 = vmatprep.subr.mxu0 0.0
  %1720 = vmatpush1.msra.mxu0 %v1701
  %1721 = vmatprep.subr.mxu0 0.0
  %1722 = vmatpush1.msra.mxu0 %v1702
  %1723 = vmatprep.subr.mxu0 0.0
  %1724 = vmatpush1.msra.mxu0 %v1703
  %1725 = vmatprep.subr.mxu0 0.0
  %1726 = vmatpush1.msra.mxu0 %v1704
  %1727 = vmatprep.subr.mxu0 0.0
  %1728 = vmatpush1.msra.mxu0 0.0
  %1729 = vmatprep.subr.mxu0 0.0
  %1730 = vmatpush1.msra.mxu0 0.0
  %1731 = vmatprep.subr.mxu0 0.0
  %1732 = vmatpush1.msra.mxu0 0.0
  %1733 = vmatprep.subr.mxu0 0.0
  %1734 = vmatpush1.msra.mxu0 0.0
  %1735 = vmatprep.subr.mxu0 0.0
  %1736 = vmatpush1.msra.mxu0 0.0
  %1737 = vmatprep.subr.mxu0 0.0
  %1738 = vmatpush1.msra.mxu0 0.0
  %1739 = vmatprep.subr.mxu0 0.0
  %1740 = vmatpush1.msra.mxu0 0.0
  %1741 = vmatprep.subr.mxu0 0.0
  %1742 = vmatpush1.msra.mxu0 0.0
  %1743 = vmatprep.subr.mxu0 0.0
  %1744 = vmatpush1.msra.mxu0 0.0
  %1745 = vmatprep.subr.mxu0 0.0
  %1746 = vmatpush1.msra.mxu0 0.0
  %1747 = vmatprep.subr.mxu0 0.0
  %1748 = vmatpush1.msra.mxu0 0.0
  %1749 = vmatprep.subr.mxu0 0.0
  %1750 = vmatpush1.msra.mxu0 0.0
  %1751 = vmatprep.subr.mxu0 0.0
  %1752 = vmatpush1.msra.mxu0 0.0
  %1753 = vmatprep.subr.mxu0 0.0
  %1754 = vmatpush1.msra.mxu0 0.0
  %1755 = vmatprep.subr.mxu0 0.0
  %1756 = vmatpush1.msra.mxu0 0.0
  %1757 = vmatprep.subr.mxu0 0.0
  %1758 = vmatpush1.msra.mxu0 0.0
  %1759 = vmatprep.subr.mxu0 0.0
  %1760 = vmatpush1.msra.mxu0 0.0
  %1761 = vmatprep.subr.mxu0 0.0
  %1762 = vmatpush1.msra.mxu0 0.0
  %1763 = vmatprep.subr.mxu0 0.0
  %1764 = vmatpush1.msra.mxu0 0.0
  %1765 = vmatprep.subr.mxu0 0.0
  %1766 = vmatpush1.msra.mxu0 0.0
  %1767 = vmatprep.subr.mxu0 0.0
  %1768 = vmatpush1.msra.mxu0 0.0
  %1769 = vmatprep.subr.mxu0 0.0
  %1770 = vmatpush1.msra.mxu0 0.0
  %1771 = vmatprep.subr.mxu0 0.0
  %1772 = vmatpush1.msra.mxu0 0.0
  %1773 = vmatprep.subr.mxu0 0.0
  %1774 = vmatpush1.msra.mxu0 0.0
  %1775 = vmatprep.subr.mxu0 0.0
  %1776 = vmatpush1.msra.mxu0 0.0
  %1777 = vmatprep.subr.mxu0 0.0
  %1778 = vmatpush1.msra.mxu0 0.0
  %1779 = vmatprep.subr.mxu0 0.0
  %1780 = vmatpush1.msra.mxu0 0.0
  %1781 = vmatprep.subr.mxu0 0.0
  %1782 = vmatpush1.msra.mxu0 0.0
  %1783 = vmatprep.mubr.f32.mxu0 0.0
  %1784 = vmatmul.mubr.f32.gmra.mrb[0].mxu0 %v1714
  %v1785 = vpop.f32.mrb[0].mxu0
  %v1786 = vadd.f32 %v1711, %v1785
  %v1787 = vpop.f32.mrb[0].mxu0
  %1788 = vmatprep.mubr.f32.mxu0 0.0
  %1789 = vmatmul.mubr.f32.gmra.mrb[0].mxu0 %v1717
  %v1790 = vpop.f32.mrb[0].mxu0
  %v1791 = vadd.f32 %v1711, %v1790
  %v1792 = vpop.f32.mrb[0].mxu0
  %1793 = vdwg.mxu0
  %v1794 = vmul.f32 %v1786, 0.5
  %v1795 = vmul.f32 %v1791, 0.5
  %v1796 = vmul.f32 %v1786, 0.044715
  %v1797 = vmul.f32 %v1791, 0.044715
  %v1798 = vmul.f32 %v1796, %v1786
  %v1799 = vmul.f32 %v1797, %v1791
  %v1800 = vmul.f32 %v1798, %v1786
  %v1801 = vmul.f32 %v1799, %v1791
  %v1802 = vadd.f32 %v1786, %v1800
  %v1803 = vadd.f32 %v1791, %v1801
  %v1804 = vmul.f32 %v1802, 0.7978846
  %v1805 = vmul.f32 %v1803, 0.7978846
  %v1806 = vtanh.pop %v1804
  %v1807 = vtanh.pop %v1805
  %v1808 = vadd.f32 %v1806, 1.0
  %v1809 = vadd.f32 %v1807, 1.0
  %v1810 = vmul.f32 %v1794, %v1808
  %v1811 = vmul.f32 %v1795, %v1809
  %s1812 = scalar_lea.vmem %s15, 64
  %v1813 = vld [vmem:[%s1812] sm:$0xff]
  %v1814 = vld [vmem:[%s1812 + $0x8] sm:$0xff]
  %v1815 = vld [vmem:[%s1812 + $0x10] sm:$0xff]
  %v1816 = vld [vmem:[%s1812 + $0x18] sm:$0xff]
  %v1817 = vld [vmem:[%s1812 + $0x20] sm:$0xff]
  %v1818 = vld [vmem:[%s1812 + $0x28] sm:$0xff]
  %v1819 = vld [vmem:[%s1812 + $0x30] sm:$0xff]
  %v1820 = vld [vmem:[%s1812 + $0x38] sm:$0xff]
  %s1821 = scalar_lea.vmem %s16, 1
  %v1822 = vld [vmem:[%s1821] sm:$0x1]
  %v1824 = vlaneseq
  %v1825 = vshrl.u32 %v1824, 7
  %v1826 = vsub.s32 0, %v1825
  %v1827 = vrot.slane %v1822, %v1826
  %v1830 = vsel %vm359, %v1810, 0
  %v1833 = vsel %vm359, %v1811, 0
  %1835 = vmatprep.subr.mxu0 0.0
  %1836 = vmatpush1.msra.mxu0 %v1813
  %1837 = vmatprep.subr.mxu0 0.0
  %1838 = vmatpush1.msra.mxu0 %v1814
  %1839 = vmatprep.subr.mxu0 0.0
  %1840 = vmatpush1.msra.mxu0 %v1815
  %1841 = vmatprep.subr.mxu0 0.0
  %1842 = vmatpush1.msra.mxu0 %v1816
  %1843 = vmatprep.subr.mxu0 0.0
  %1844 = vmatpush1.msra.mxu0 %v1817
  %1845 = vmatprep.subr.mxu0 0.0
  %1846 = vmatpush1.msra.mxu0 %v1818
  %1847 = vmatprep.subr.mxu0 0.0
  %1848 = vmatpush1.msra.mxu0 %v1819
  %1849 = vmatprep.subr.mxu0 0.0
  %1850 = vmatpush1.msra.mxu0 %v1820
  %1851 = vmatprep.subr.mxu0 0.0
  %1852 = vmatpush1.msra.mxu0 0.0
  %1853 = vmatprep.subr.mxu0 0.0
  %1854 = vmatpush1.msra.mxu0 0.0
  %1855 = vmatprep.subr.mxu0 0.0
  %1856 = vmatpush1.msra.mxu0 0.0
  %1857 = vmatprep.subr.mxu0 0.0
  %1858 = vmatpush1.msra.mxu0 0.0
  %1859 = vmatprep.subr.mxu0 0.0
  %1860 = vmatpush1.msra.mxu0 0.0
  %1861 = vmatprep.subr.mxu0 0.0
  %1862 = vmatpush1.msra.mxu0 0.0
  %1863 = vmatprep.subr.mxu0 0.0
  %1864 = vmatpush1.msra.mxu0 0.0
  %1865 = vmatprep.subr.mxu0 0.0
  %1866 = vmatpush1.msra.mxu0 0.0
  %1867 = vmatprep.subr.mxu0 0.0
  %1868 = vmatpush1.msra.mxu0 0.0
  %1869 = vmatprep.subr.mxu0 0.0
  %1870 = vmatpush1.msra.mxu0 0.0
  %1871 = vmatprep.subr.mxu0 0.0
  %1872 = vmatpush1.msra.mxu0 0.0
  %1873 = vmatprep.subr.mxu0 0.0
  %1874 = vmatpush1.msra.mxu0 0.0
  %1875 = vmatprep.subr.mxu0 0.0
  %1876 = vmatpush1.msra.mxu0 0.0
  %1877 = vmatprep.subr.mxu0 0.0
  %1878 = vmatpush1.msra.mxu0 0.0
  %1879 = vmatprep.subr.mxu0 0.0
  %1880 = vmatpush1.msra.mxu0 0.0
  %1881 = vmatprep.subr.mxu0 0.0
  %1882 = vmatpush1.msra.mxu0 0.0
  %1883 = vmatprep.subr.mxu0 0.0
  %1884 = vmatpush1.msra.mxu0 0.0
  %1885 = vmatprep.subr.mxu0 0.0
  %1886 = vmatpush1.msra.mxu0 0.0
  %1887 = vmatprep.subr.mxu0 0.0
  %1888 = vmatpush1.msra.mxu0 0.0
  %1889 = vmatprep.subr.mxu0 0.0
  %1890 = vmatpush1.msra.mxu0 0.0
  %1891 = vmatprep.subr.mxu0 0.0
  %1892 = vmatpush1.msra.mxu0 0.0
  %1893 = vmatprep.subr.mxu0 0.0
  %1894 = vmatpush1.msra.mxu0 0.0
  %1895 = vmatprep.subr.mxu0 0.0
  %1896 = vmatpush1.msra.mxu0 0.0
  %1897 = vmatprep.subr.mxu0 0.0
  %1898 = vmatpush1.msra.mxu0 0.0
  %1899 = vmatprep.mubr.f32.mxu0 0.0
  %1900 = vmatmul.mubr.f32.gmra.mrb[0].mxu0 %v1830
  %v1901 = vpop.f32.mrb[0].mxu0
  %v1902 = vadd.f32 %v1827, %v1901
  %v1903 = vpop.f32.mrb[0].mxu0
  %1904 = vmatprep.mubr.f32.mxu0 0.0
  %1905 = vmatmul.mubr.f32.gmra.mrb[0].mxu0 %v1833
  %v1906 = vpop.f32.mrb[0].mxu0
  %v1907 = vadd.f32 %v1827, %v1906
  %v1908 = vpop.f32.mrb[0].mxu0
  %1909 = vdwg.mxu0
  %v1910 = vadd.f32 %v1902, %v1652
  %v1911 = vadd.f32 %v1907, %v1653
  %v1912 = vld [vmem:[%s17] sm:$0x1]
  %v1913 = vld [vmem:[%s18] sm:$0x1]
  %v1914 = vsel %vm109, %v1910, 0.0
  %1915 = vadd.xlane.f32.xlu0 %v1914
  %v1916 = vpop.xlane.xlu0 %1915
  %v1917 = vsel %vm109, %v1911, 0.0
  %1918 = vadd.xlane.f32.xlu0 %v1917
  %v1919 = vpop.xlane.xlu0 %1918
  %v1920 = vmul.f32 %v1916, %v735
  %v1921 = vmul.f32 %v1919, %v735
  %v1922 = vsub.f32 %v1910, %v1920
  %v1923 = vsub.f32 %v1911, %v1921
  %v1924 = vmul.f32 %v1922, %v1922
  %v1925 = vmul.f32 %v1923, %v1923
  %v1926 = vsel %vm109, %v1924, 0.0
  %1927 = vadd.xlane.f32.xlu0 %v1926
  %v1928 = vpop.xlane.xlu0 %1927
  %v1929 = vsel %vm109, %v1925, 0.0
  %1930 = vadd.xlane.f32.xlu0 %v1929
  %v1931 = vpop.xlane.xlu0 %1930
  %v1932 = vmul.f32 %v1928, %v735
  %v1933 = vmul.f32 %v1931, %v735
  %v1934 = vadd.f32 %v1932, 1e-06
  %v1935 = vadd.f32 %v1933, 1e-06
  %v1936 = vrsqrt.pop %v1934
  %v1937 = vrsqrt.pop %v1935
  %v1938 = vmul.f32 %v1922, %v1936
  %v1939 = vmul.f32 %v1923, %v1937
  %v1941 = vlaneseq
  %v1942 = vshrl.u32 %v1941, 7
  %v1943 = vsub.s32 0, %v1942
  %v1944 = vrot.slane %v1912, %v1943
  %v1946 = vmul.f32 %v1938, %v1944
  %v1947 = vmul.f32 %v1939, %v1944
  %v1949 = vlaneseq
  %v1950 = vshrl.u32 %v1949, 7
  %v1951 = vsub.s32 0, %v1950
  %v1952 = vrot.slane %v1913, %v1951
  %v1954 = vadd.f32 %v1946, %v1952
  %v1955 = vadd.f32 %v1947, %v1952
  %v1956 = vld [vmem:[%s19] sm:$0x1]
  %v1957 = vld [vmem:[#allocation2] sm:$0x1]
  %1959 = vset.pattern.permute.xlu0 0
  %1960 = vperm.xlu0 %1959, %v1957
  %v1961 = vpop.permute.xlu0 %1960
  %v1963 = vlaneseq
  %v1964 = vshrl.u32 %v1963, 7
  %v1965 = vsub.s32 0, %v1964
  %v1966 = vrot.slane %v1961, %v1965
  %v1968 = vsel %vm109, %v1956, 0
  %v1971 = vsel %vm109, %v1954, 0
  %v1974 = vsel %vm109, %v1955, 0
  %1976 = vmatprep.subr.mxu0 0.0
  %1977 = vmatpush1.xpose.msra.mxu0 %v1971
  %1978 = vmatprep.subr.mxu0 0.0
  %1979 = vmatpush1.xpose.msra.mxu0 %v1974
  %1980 = vmatprep.subr.mxu0 0.0
  %1981 = vmatpush1.xpose.msra.mxu0 0.0
  %1982 = vmatprep.subr.mxu0 0.0
  %1983 = vmatpush1.xpose.msra.mxu0 0.0
  %1984 = vmatprep.subr.mxu0 0.0
  %1985 = vmatpush1.xpose.msra.mxu0 0.0
  %1986 = vmatprep.subr.mxu0 0.0
  %1987 = vmatpush1.xpose.msra.mxu0 0.0
  %1988 = vmatprep.subr.mxu0 0.0
  %1989 = vmatpush1.xpose.msra.mxu0 0.0
  %1990 = vmatprep.subr.mxu0 0.0
  %1991 = vmatpush1.xpose.msra.mxu0 0.0
  %1992 = vmatprep.subr.mxu0 0.0
  %1993 = vmatpush1.xpose.msra.mxu0 0.0
  %1994 = vmatprep.subr.mxu0 0.0
  %1995 = vmatpush1.xpose.msra.mxu0 0.0
  %1996 = vmatprep.subr.mxu0 0.0
  %1997 = vmatpush1.xpose.msra.mxu0 0.0
  %1998 = vmatprep.subr.mxu0 0.0
  %1999 = vmatpush1.xpose.msra.mxu0 0.0
  %2000 = vmatprep.subr.mxu0 0.0
  %2001 = vmatpush1.xpose.msra.mxu0 0.0
  %2002 = vmatprep.subr.mxu0 0.0
  %2003 = vmatpush1.xpose.msra.mxu0 0.0
  %2004 = vmatprep.subr.mxu0 0.0
  %2005 = vmatpush1.xpose.msra.mxu0 0.0
  %2006 = vmatprep.subr.mxu0 0.0
  %2007 = vmatpush1.xpose.msra.mxu0 0.0
  %2008 = vmatprep.subr.mxu0 0.0
  %2009 = vmatpush1.xpose.msra.mxu0 0.0
  %2010 = vmatprep.subr.mxu0 0.0
  %2011 = vmatpush1.xpose.msra.mxu0 0.0
  %2012 = vmatprep.subr.mxu0 0.0
  %2013 = vmatpush1.xpose.msra.mxu0 0.0
  %2014 = vmatprep.subr.mxu0 0.0
  %2015 = vmatpush1.xpose.msra.mxu0 0.0
  %2016 = vmatprep.subr.mxu0 0.0
  %2017 = vmatpush1.xpose.msra.mxu0 0.0
  %2018 = vmatprep.subr.mxu0 0.0
  %2019 = vmatpush1.xpose.msra.mxu0 0.0
  %2020 = vmatprep.subr.mxu0 0.0
  %2021 = vmatpush1.xpose.msra.mxu0 0.0
  %2022 = vmatprep.subr.mxu0 0.0
  %2023 = vmatpush1.xpose.msra.mxu0 0.0
  %2024 = vmatprep.subr.mxu0 0.0
  %2025 = vmatpush1.xpose.msra.mxu0 0.0
  %2026 = vmatprep.subr.mxu0 0.0
  %2027 = vmatpush1.xpose.msra.mxu0 0.0
  %2028 = vmatprep.subr.mxu0 0.0
  %2029 = vmatpush1.xpose.msra.mxu0 0.0
  %2030 = vmatprep.subr.mxu0 0.0
  %2031 = vmatpush1.xpose.msra.mxu0 0.0
  %2032 = vmatprep.subr.mxu0 0.0
  %2033 = vmatpush1.xpose.msra.mxu0 0.0
  %2034 = vmatprep.subr.mxu0 0.0
  %2035 = vmatpush1.xpose.msra.mxu0 0.0
  %2036 = vmatprep.subr.mxu0 0.0
  %2037 = vmatpush1.xpose.msra.mxu0 0.0
  %2038 = vmatprep.subr.mxu0 0.0
  %2039 = vmatpush1.xpose.msra.mxu0 0.0
  %2040 = vmatprep.mubr.f32.mxu0 0.0
  %2041 = vmatmul.mubr.f32.gmra.mrb[0].mxu0 %v1968
  %v2042 = vpop.f32.mrb[0].mxu0
  %v2043 = vadd.f32 %v1966, %v2042
  %v2044 = vpop.f32.mrb[0].mxu0
  %2045 = vdwg.mxu0
  %v2046 = vxor.u32 %v2043, 2147483648
  %v2047 = vmul.f32 %v2046, 1.442695
  %v2048 = vpow.pop %v2047
  %v2049 = vadd.f32 %v2048, 1.0
  %v2050 = vrcp.pop %v2049
  %v2051 = vmul.f32 1.0, %v2050
  %v2052 = vld [vmem:[%s2] sm:$0x1]
  %v2053 = vmul.f32 %v2051, %v2052
  %vm2054 = vcmask 122880
  %2055 = vst.msk [vmem:[%s21] sm:$0x1] %vm2054, %v2053
  // Predicated region
  $region86: #{ext_transformer_encoder.1} parent=0 // pred_check
    _
  $region87: #{ext_transformer_encoder.1} parent=0 // pred_check_branch
    %2057 = sbr.rel (0) target = $region89
  $region88: #{ext_transformer_encoder.1} parent=0 // pred_region
    _
  $region89: #{ext_transformer_encoder.1} parent=0 // pred_fallthru
    _
  // Predicated region
  $region90: #{ext_transformer_encoder.1} parent=0 // pred_check
    _
  $region91: #{ext_transformer_encoder.1} parent=0 // pred_check_branch
    %2059 = sbr.rel (0) target = $region93
  $region92: #{ext_transformer_encoder.1} parent=0 // pred_region
    _
  $region93: #{ext_transformer_encoder.1} parent=0 // pred_fallthru
    _

</llo_original>
